<compile_context>
chip_gen: v7x
topology: tpu7x:2x2x1
jax: 0.10.0
libtpu: 0.0.40
codegen_flags: <defaults>
</compile_context>

<pallas_src>
import numpy as np
import jax
import jax.numpy as jnp
from jax.experimental import pallas as pl
from jax.experimental.pallas import tpu as pltpu


_HEAD_ORDER = (("frame_event", "frame", "event"),     # weight 1.0
               ("frame_eframe", "frame", "eframe"),   # weight 0.1
               ("event_eframe", "event", "eframe"))   # weight 0.1
_INPUT_SLOTS = ("frame", "event", "eframe")


# -----------------------------------------------------------------------------
# Fused Pallas kernel: the whole MutualInformationLoss forward in one invocation
# -----------------------------------------------------------------------------
def mi_fused_kernel(x_ref, wc_ref, ww_ref, be_ref, eps_ref, o_ref):
    # x_ref   (3K+1, B*S)   im2col patches of [frame | event | eframe] + ones row
    # wc_ref  (6C, 3K+1)    block-structured conv1 weights (+ bias column)
    # ww_ref  (6, C, 2L, S) folded layer3/4 -> adaptive_pool -> fc per path
    # be_ref  (2L, 6*B)     folded bias, one column per (path, batch)
    # eps_ref (2, L, 3*B)   reparametrization noise ([0] = rgb, [1] = depth)
    # o_ref   (1, 128)      lane-dense output; every lane holds the total loss
    NP, C, twoL, S = ww_ref.shape          # 6 paths, channels, 2*latent, Ho*Wo
    L = twoL // 2
    B = be_ref.shape[1] // NP
    nh = NP // 2                           # number of heads
    nc = nh * B                            # columns per role (head-major)

    # ---- all six conv1 paths in ONE MXU push (bias folded via the ones row) ----
    yt = jnp.dot(wc_ref[...], x_ref[...], preferred_element_type=jnp.float32)
    yt = jnp.where(yt >= 0.0, yt, 0.01 * yt)            # LeakyReLU(0.01)

    # ---- folded linear tail: per-(path, batch) lane-slice reductions.
    # Each (2L,1) column sum is mask-placed into column p*B+b (avoids narrow-lane
    # concatenation and the old N=2 selector matmul).
    col_idx = jax.lax.broadcasted_iota(jnp.int32, (twoL, NP * B), 1)
    outt = be_ref[...]                                   # start from the bias
    for p in range(NP):
        wrows = [ww_ref[p, c] for c in range(C)]         # each (2L, S)
        for b in range(B):
            yb = yt[p * C:(p + 1) * C, b * S:(b + 1) * S]         # (C, S)
            vt = yb[0:1, :] * wrows[0]
            for c in range(1, C):
                vt = vt + yb[c:c + 1, :] * wrows[c]               # (2L, S)
            colsum = jnp.sum(vt, axis=-1, keepdims=True)          # (2L, 1)
            outt = outt + jnp.where(col_idx == p * B + b, colsum, 0.0)

    mu = jnp.tanh(outt[0:L, :])                          # (L, NP*B)
    lv = jnp.tanh(outt[L:twoL, :])
    mu_r, mu_d = mu[:, 0:nc], mu[:, nc:2 * nc]           # rgb / depth (L, nh*B)
    lv_r, lv_d = lv[:, 0:nc], lv[:, nc:2 * nc]

    # reparametrize: z = eps * exp(0.5*logvar) + mu
    z_r = eps_ref[0] * jnp.exp(0.5 * lv_r) + mu_r
    z_d = eps_ref[1] * jnp.exp(0.5 * lv_d) + mu_d

    # bidirectional KL of Normal(mu, scale=exp(logvar)); Independent(.,1) sums the
    # latent dim, torch.mean averages the batch (the /B below).
    var_r = jnp.exp(2.0 * lv_r)
    var_d = jnp.exp(2.0 * lv_d)
    dmu2 = (mu_r - mu_d) ** 2
    kl_rd = (lv_d - lv_r) + (var_r + dmu2) / (2.0 * var_d) - 0.5
    kl_dr = (lv_r - lv_d) + (var_d + dmu2) / (2.0 * var_r) - 0.5

    # BCE(reduction='sum') with torch's -100 clamp; log(sigmoid) via softplus.
    def softplus(x):
        return jnp.maximum(x, 0.0) + jnp.log(1.0 + jnp.exp(-jnp.abs(x)))

    p_r = jax.nn.sigmoid(z_r)
    p_d = jax.nn.sigmoid(z_d)
    log_pr = jnp.maximum(-softplus(-z_r), -100.0)
    log_1pr = jnp.maximum(-softplus(z_r), -100.0)
    log_pd = jnp.maximum(-softplus(-z_d), -100.0)
    log_1pd = jnp.maximum(-softplus(z_d), -100.0)
    ce = -(p_d * log_pr + (1.0 - p_d) * log_1pr) \
         - (p_r * log_pd + (1.0 - p_r) * log_1pd)        # (L, nh*B)

    # per-head weighting (head 0 -> 1.0, heads 1,2 -> 0.1); columns are h*B + b
    w = jnp.where(jax.lax.broadcasted_iota(jnp.int32, (1, nc), 1) < B, 1.0, 0.1)

    def _sum_all(a):                                      # -> (1, 1)
        return jnp.sum(jnp.sum(a, axis=1, keepdims=True), axis=0, keepdims=True)

    total = _sum_all(ce * w) - _sum_all((kl_rd + kl_dr) * w) * (1.0 / B)
    o_ref[...] = jnp.broadcast_to(total, o_ref.shape)


# -----------------------------------------------------------------------------
# One-time parameter folding (hoisted out of the per-call forward)
# -----------------------------------------------------------------------------
def _adaptive_pool_matrix(in_size, out_size):
    P = np.zeros((out_size, in_size), dtype=np.float32)
    for o in range(out_size):
        s = (o * in_size) // out_size
        e = -((-(o + 1) * in_size) // out_size)           # ceil
        P[o, s:e] = 1.0 / (e - s)
    return P


def _conv_tap_matrix(in_size, out_size, k=4, s=2, p=1):
    # T[h, m, a] = 1 iff input row h feeds output row m through kernel tap a
    T = np.zeros((in_size, out_size, k), dtype=np.float32)
    for m in range(out_size):
        for a in range(k):
            h = s * m + a - p
            if 0 <= h < in_size:
                T[h, m, a] = 1.0
    return T


def _fold_tail(w_conv2, b_conv2, fc_w, fc_b, h1, pool_out=32):
    """Fold conv(k4,s2,p1) -> AdaptiveAvgPool2d(32,32) -> flatten -> [fc1|fc2]
    (all linear) into an affine map on the conv1 activation y (C, h1, h1).
    fc_w: (C*pool*pool, 2L), fc_b: (2L,).  Returns (C, h1*h1, 2L), (2L,)."""
    C = w_conv2.shape[0]
    h2 = (h1 + 2 - 4) // 2 + 1
    P = _adaptive_pool_matrix(h2, pool_out)               # (pool_out, h2)
    T = _conv_tap_matrix(h1, h2)                          # (h1, h2, 4)
    fc4 = fc_w.reshape(C, pool_out, pool_out, -1)         # (C, 32, 32, 2L)
    wpool = jnp.einsum('um,vn,cuvl->cmnl', P, P, fc4)     # (C, h2, h2, 2L)
    weff = jnp.einsum('hma,wnb,ocab,omnl->chwl', T, T, w_conv2, wpool)
    beff = fc_b + jnp.einsum('o,omnl->l', b_conv2, wpool)
    return weff.reshape(C, h1 * h1, -1), beff


def fold_params(params, x_shape):
    """Runs ONCE; produces the dense packed operands consumed by the kernel."""
    B, Cin, H, W = x_shape
    head0 = params[_HEAD_ORDER[0][0]]
    C = head0['w1'].shape[0]
    K = Cin * 16
    h1 = (H + 2 - 4) // 2 + 1                             # conv1 output spatial
    NP = 2 * len(_HEAD_ORDER)

    # role-major path order: paths 0..2 = rgb branch of heads 0..2, 3..5 = depth
    paths = []
    for role in ("rgb", "dep"):
        for (head, rgb_in, dep_in) in _HEAD_ORDER:
            hp = params[head]
            if role == "rgb":
                paths.append((hp['w1'], hp['b1'], hp['w3'], hp['b3'],
                              jnp.concatenate([hp['fc1_rgb_w'], hp['fc2_rgb_w']], axis=1),
                              jnp.concatenate([hp['fc1_rgb_b'].reshape(-1),
                                               hp['fc2_rgb_b'].reshape(-1)]),
                              _INPUT_SLOTS.index(rgb_in)))
            else:
                paths.append((hp['w2'], hp['b2'], hp['w4'], hp['b4'],
                              jnp.concatenate([hp['fc1_dep_w'], hp['fc2_dep_w']], axis=1),
                              jnp.concatenate([hp['fc1_dep_b'].reshape(-1),
                                               hp['fc2_dep_b'].reshape(-1)]),
                              _INPUT_SLOTS.index(dep_in)))

    wc = jnp.zeros((NP * C, 3 * K + 1), jnp.float32)      # block conv1 weights
    ww, be_cols = [], []
    for p, (wconv, bconv, wtail, btail, fcw, fcb, slot) in enumerate(paths):
        wc = wc.at[p * C:(p + 1) * C, slot * K:(slot + 1) * K].set(wconv.reshape(C, K))
        wc = wc.at[p * C:(p + 1) * C, 3 * K].set(bconv)   # bias column (ones row)
        weff, beff = _fold_tail(wtail, btail, fcw, fcb, h1)
        ww.append(weff.transpose(0, 2, 1))                # (C, 2L, S)
        be_cols.append(beff)

    return {'wc': wc,                                                  # (6C, 3K+1)
            'ww': jnp.stack(ww),                                       # (6, C, 2L, S)
            'be': jnp.repeat(jnp.stack(be_cols, axis=1), B, axis=1)}   # (2L, 6B)


# -----------------------------------------------------------------------------
# Per-call forward (jitted): im2col + eps sampling + one pallas_call
# -----------------------------------------------------------------------------
def _im2col_T(x, k=4, s=2, p=1):
    """x: (B, Cin, H, W) -> patches^T (Cin*k*k, B*Ho*Wo); columns batch-major."""
    B, Cin, H, W = x.shape
    xp = jnp.pad(x, ((0, 0), (0, 0), (p, p), (p, p)))
    Ho = (H + 2 * p - k) // s + 1
    Wo = (W + 2 * p - k) // s + 1
    cols = []
    for dh in range(k):
        for dw in range(k):
            cols.append(xp[:, :, dh:dh + s * Ho:s, dw:dw + s * Wo:s])
    pat = jnp.stack(cols, axis=2).reshape(B, Cin * k * k, Ho * Wo)
    return pat.transpose(1, 0, 2).reshape(Cin * k * k, B * Ho * Wo)


def mutual_information_loss(folded, event, frame, eframe, key):
    """Equivalent of MutualInformationLoss.forward(event, frame, eframe)."""
    B = event.shape[0]
    feats = {'event': event, 'frame': frame, 'eframe': eframe}
    # TODO(synk): conv1 im2col stays as XLA glue; in-kernel tap construction would
    # need per-tap strided gathers of the padded input.
    pats = [_im2col_T(feats[name]) for name in _INPUT_SLOTS]
    m1 = pats[0].shape[1]
    x = jnp.concatenate(pats + [jnp.ones((1, m1), jnp.float32)], axis=0)

    L = folded['be'].shape[0] // 2
    eps = jax.random.normal(key, (2, L, len(_HEAD_ORDER) * B), jnp.float32)

    out = pl.pallas_call(
        mi_fused_kernel,
        out_shape=jax.ShapeDtypeStruct((1, 128), jnp.float32),
        in_specs=[pl.BlockSpec(memory_space=pltpu.MemorySpace.VMEM)] * 5,
        out_specs=pl.BlockSpec(memory_space=pltpu.MemorySpace.VMEM),
    )(x, folded['wc'], folded['ww'], folded['be'], eps)
    return out[0, 0]


# -----------------------------------------------------------------------------
# Deterministic parameter init (PyTorch default shapes)
# -----------------------------------------------------------------------------
def _uniform(key, shape, bound):
    return jax.random.uniform(key, shape, jnp.float32, -bound, bound)


def init_mi_reg_params(key, input_channels, channels, latent_size=4):
    keys = jax.random.split(key, 16)
    F_dim = channels * 32 * 32
    cb_in = 1.0 / np.sqrt(input_channels * 16)
    cb_ch = 1.0 / np.sqrt(channels * 16)
    lb = 1.0 / np.sqrt(F_dim)
    return {
        'w1': _uniform(keys[0], (channels, input_channels, 4, 4), cb_in),
        'b1': _uniform(keys[1], (channels,), cb_in),
        'w2': _uniform(keys[2], (channels, input_channels, 4, 4), cb_in),
        'b2': _uniform(keys[3], (channels,), cb_in),
        'w3': _uniform(keys[4], (channels, channels, 4, 4), cb_ch),
        'b3': _uniform(keys[5], (channels,), cb_ch),
        'w4': _uniform(keys[6], (channels, channels, 4, 4), cb_ch),
        'b4': _uniform(keys[7], (channels,), cb_ch),
        # Linear weights stored as (in, out) so x @ W + b
        'fc1_rgb_w': _uniform(keys[8], (F_dim, latent_size), lb),
        'fc1_rgb_b': _uniform(keys[9], (1, latent_size), lb),
        'fc2_rgb_w': _uniform(keys[10], (F_dim, latent_size), lb),
        'fc2_rgb_b': _uniform(keys[11], (1, latent_size), lb),
        'fc1_dep_w': _uniform(keys[12], (F_dim, latent_size), lb),
        'fc1_dep_b': _uniform(keys[13], (1, latent_size), lb),
        'fc2_dep_w': _uniform(keys[14], (F_dim, latent_size), lb),
        'fc2_dep_b': _uniform(keys[15], (1, latent_size), lb),
    }


def init_mutual_information_loss_params(key, input_channel, channels):
    k1, k2, k3 = jax.random.split(key, 3)
    return {
        'frame_event': init_mi_reg_params(k1, input_channel, channels),
        'frame_eframe': init_mi_reg_params(k2, input_channel, channels),
        'event_eframe': init_mi_reg_params(k3, input_channel, channels),
    }


# -----------------------------------------------------------------------------
# Main
# -----------------------------------------------------------------------------
if __name__ == "__main__":
    B, C_IN, H, W = 2, 4, 16, 16
    CHANNELS = 4

    root = jax.random.PRNGKey(0)
    k_params, k_event, k_frame, k_eframe, k_eps = jax.random.split(root, 5)

    params = init_mutual_information_loss_params(k_params, C_IN, CHANNELS)
    event = jax.random.normal(k_event, (B, C_IN, H, W), jnp.float32)
    frame = jax.random.normal(k_frame, (B, C_IN, H, W), jnp.float32)
    eframe = jax.random.normal(k_eframe, (B, C_IN, H, W), jnp.float32)

    # Parameter folding runs ONCE (hoisted out of the per-call forward).
    folded = fold_params(params, event.shape)

    fwd = jax.jit(mutual_information_loss)
    loss = fwd(folded, event, frame, eframe, k_eps)
    jax.block_until_ready(loss)
    assert loss.shape == () and bool(jnp.isfinite(loss))
    print("KERNEL_OK")
</pallas_src>

<mosaic_0001>
module attributes {stable_mosaic.version = 11 : i64} {
  func.func @mi_fused_kernel(%arg0: memref<193x128xf32, #tpu.memory_space<vmem>>, %arg1: memref<24x193xf32, #tpu.memory_space<vmem>>, %arg2: memref<6x4x8x64xf32, #tpu.memory_space<vmem>>, %arg3: memref<8x12xf32, #tpu.memory_space<vmem>>, %arg4: memref<2x4x6xf32, #tpu.memory_space<vmem>>, %arg5: memref<1x128xf32, #tpu.memory_space<vmem>>) attributes {dimension_semantics = [], scalar_prefetch = 0 : i64, scratch_operands = 0 : i64, tpu.core_type = #tpu.core_type<tc>} {
    %c0 = arith.constant 0 : index
    %c0_0 = arith.constant 0 : index
    %0 = vector.load %arg1[%c0, %c0_0] : memref<24x193xf32, #tpu.memory_space<vmem>>, vector<24x193xf32>
    %c0_1 = arith.constant 0 : index
    %c0_2 = arith.constant 0 : index
    %1 = vector.load %arg0[%c0_1, %c0_2] : memref<193x128xf32, #tpu.memory_space<vmem>>, vector<193x128xf32>
    %cst = arith.constant dense<0.000000e+00> : vector<24x128xf32>
    %2 = tpu.matmul %0, %1, %cst {dimension_numbers = #tpu.dot_dimension_numbers<[1], [0], [0], [1], [0, 0, 1, 1], [], []>} : vector<24x193xf32>, vector<193x128xf32>, vector<24x128xf32> -> vector<24x128xf32>
    %cst_3 = arith.constant 0.000000e+00 : f32
    %3 = vector.broadcast %cst_3 : f32 to vector<24x128xf32>
    %4 = arith.cmpf oge, %2, %3 : vector<24x128xf32>
    %cst_4 = arith.constant 0.00999999977 : f32
    %5 = vector.broadcast %cst_4 : f32 to vector<24x128xf32>
    %6 = arith.mulf %5, %2 : vector<24x128xf32>
    %7 = arith.select %4, %2, %6 : vector<24x128xi1>, vector<24x128xf32>
    %8 = tpu.iota {dimensions = array<i32: 1>} : vector<8x12xi32>
    %c0_5 = arith.constant 0 : index
    %c0_6 = arith.constant 0 : index
    %9 = vector.load %arg3[%c0_5, %c0_6] : memref<8x12xf32, #tpu.memory_space<vmem>>, vector<8x12xf32>
    %c0_7 = arith.constant 0 : index
    %c0_8 = arith.constant 0 : index
    %c0_9 = arith.constant 0 : index
    %c0_10 = arith.constant 0 : index
    %10 = vector.load %arg2[%c0_7, %c0_8, %c0_9, %c0_10] : memref<6x4x8x64xf32, #tpu.memory_space<vmem>>, vector<1x1x8x64xf32>
    %11 = vector.shape_cast %10 : vector<1x1x8x64xf32> to vector<8x64xf32>
    %c0_11 = arith.constant 0 : index
    %c1 = arith.constant 1 : index
    %c0_12 = arith.constant 0 : index
    %c0_13 = arith.constant 0 : index
    %12 = vector.load %arg2[%c0_11, %c1, %c0_12, %c0_13] : memref<6x4x8x64xf32, #tpu.memory_space<vmem>>, vector<1x1x8x64xf32>
    %13 = vector.shape_cast %12 : vector<1x1x8x64xf32> to vector<8x64xf32>
    %c0_14 = arith.constant 0 : index
    %c2 = arith.constant 2 : index
    %c0_15 = arith.constant 0 : index
    %c0_16 = arith.constant 0 : index
    %14 = vector.load %arg2[%c0_14, %c2, %c0_15, %c0_16] : memref<6x4x8x64xf32, #tpu.memory_space<vmem>>, vector<1x1x8x64xf32>
    %15 = vector.shape_cast %14 : vector<1x1x8x64xf32> to vector<8x64xf32>
    %c0_17 = arith.constant 0 : index
    %c3 = arith.constant 3 : index
    %c0_18 = arith.constant 0 : index
    %c0_19 = arith.constant 0 : index
    %16 = vector.load %arg2[%c0_17, %c3, %c0_18, %c0_19] : memref<6x4x8x64xf32, #tpu.memory_space<vmem>>, vector<1x1x8x64xf32>
    %17 = vector.shape_cast %16 : vector<1x1x8x64xf32> to vector<8x64xf32>
    %18 = vector.extract_strided_slice %7 {offsets = [0, 0], sizes = [4, 64], strides = [1, 1]} : vector<24x128xf32> to vector<4x64xf32>
    %19 = vector.extract_strided_slice %18 {offsets = [0, 0], sizes = [1, 64], strides = [1, 1]} : vector<4x64xf32> to vector<1x64xf32>
    %20 = vector.broadcast %19 : vector<1x64xf32> to vector<8x64xf32>
    %21 = arith.mulf %20, %11 : vector<8x64xf32>
    %22 = vector.extract_strided_slice %18 {offsets = [1, 0], sizes = [1, 64], strides = [1, 1]} : vector<4x64xf32> to vector<1x64xf32>
    %23 = vector.broadcast %22 : vector<1x64xf32> to vector<8x64xf32>
    %24 = arith.mulf %23, %13 : vector<8x64xf32>
    %25 = arith.addf %21, %24 : vector<8x64xf32>
    %26 = vector.extract_strided_slice %18 {offsets = [2, 0], sizes = [1, 64], strides = [1, 1]} : vector<4x64xf32> to vector<1x64xf32>
    %27 = vector.broadcast %26 : vector<1x64xf32> to vector<8x64xf32>
    %28 = arith.mulf %27, %15 : vector<8x64xf32>
    %29 = arith.addf %25, %28 : vector<8x64xf32>
    %30 = vector.extract_strided_slice %18 {offsets = [3, 0], sizes = [1, 64], strides = [1, 1]} : vector<4x64xf32> to vector<1x64xf32>
    %31 = vector.broadcast %30 : vector<1x64xf32> to vector<8x64xf32>
    %32 = arith.mulf %31, %17 : vector<8x64xf32>
    %33 = arith.addf %29, %32 : vector<8x64xf32>
    %cst_20 = arith.constant dense<0.000000e+00> : vector<8xf32>
    %34 = vector.multi_reduction <add>, %33, %cst_20 [1] : vector<8x64xf32> to vector<8xf32>
    %35 = vector.shape_cast %34 : vector<8xf32> to vector<8x1xf32>
    %c0_i32 = arith.constant 0 : i32
    %36 = vector.broadcast %c0_i32 : i32 to vector<8x12xi32>
    %37 = arith.cmpi eq, %8, %36 : vector<8x12xi32>
    %cst_21 = arith.constant 0.000000e+00 : f32
    %38 = vector.shape_cast %35 : vector<8x1xf32> to vector<8x1xf32>
    %39 = vector.broadcast %38 : vector<8x1xf32> to vector<8x12xf32>
    %40 = vector.broadcast %cst_21 : f32 to vector<8x12xf32>
    %41 = arith.select %37, %39, %40 : vector<8x12xi1>, vector<8x12xf32>
    %42 = arith.addf %9, %41 : vector<8x12xf32>
    %43 = vector.extract_strided_slice %7 {offsets = [0, 64], sizes = [4, 64], strides = [1, 1]} : vector<24x128xf32> to vector<4x64xf32>
    %44 = vector.extract_strided_slice %43 {offsets = [0, 0], sizes = [1, 64], strides = [1, 1]} : vector<4x64xf32> to vector<1x64xf32>
    %45 = vector.broadcast %44 : vector<1x64xf32> to vector<8x64xf32>
    %46 = arith.mulf %45, %11 : vector<8x64xf32>
    %47 = vector.extract_strided_slice %43 {offsets = [1, 0], sizes = [1, 64], strides = [1, 1]} : vector<4x64xf32> to vector<1x64xf32>
    %48 = vector.broadcast %47 : vector<1x64xf32> to vector<8x64xf32>
    %49 = arith.mulf %48, %13 : vector<8x64xf32>
    %50 = arith.addf %46, %49 : vector<8x64xf32>
    %51 = vector.extract_strided_slice %43 {offsets = [2, 0], sizes = [1, 64], strides = [1, 1]} : vector<4x64xf32> to vector<1x64xf32>
    %52 = vector.broadcast %51 : vector<1x64xf32> to vector<8x64xf32>
    %53 = arith.mulf %52, %15 : vector<8x64xf32>
    %54 = arith.addf %50, %53 : vector<8x64xf32>
    %55 = vector.extract_strided_slice %43 {offsets = [3, 0], sizes = [1, 64], strides = [1, 1]} : vector<4x64xf32> to vector<1x64xf32>
    %56 = vector.broadcast %55 : vector<1x64xf32> to vector<8x64xf32>
    %57 = arith.mulf %56, %17 : vector<8x64xf32>
    %58 = arith.addf %54, %57 : vector<8x64xf32>
    %cst_22 = arith.constant dense<0.000000e+00> : vector<8xf32>
    %59 = vector.multi_reduction <add>, %58, %cst_22 [1] : vector<8x64xf32> to vector<8xf32>
    %60 = vector.shape_cast %59 : vector<8xf32> to vector<8x1xf32>
    %c1_i32 = arith.constant 1 : i32
    %61 = vector.broadcast %c1_i32 : i32 to vector<8x12xi32>
    %62 = arith.cmpi eq, %8, %61 : vector<8x12xi32>
    %cst_23 = arith.constant 0.000000e+00 : f32
    %63 = vector.shape_cast %60 : vector<8x1xf32> to vector<8x1xf32>
    %64 = vector.broadcast %63 : vector<8x1xf32> to vector<8x12xf32>
    %65 = vector.broadcast %cst_23 : f32 to vector<8x12xf32>
    %66 = arith.select %62, %64, %65 : vector<8x12xi1>, vector<8x12xf32>
    %67 = arith.addf %42, %66 : vector<8x12xf32>
    %c1_24 = arith.constant 1 : index
    %c0_25 = arith.constant 0 : index
    %c0_26 = arith.constant 0 : index
    %c0_27 = arith.constant 0 : index
    %68 = vector.load %arg2[%c1_24, %c0_25, %c0_26, %c0_27] : memref<6x4x8x64xf32, #tpu.memory_space<vmem>>, vector<1x1x8x64xf32>
    %69 = vector.shape_cast %68 : vector<1x1x8x64xf32> to vector<8x64xf32>
    %c1_28 = arith.constant 1 : index
    %c1_29 = arith.constant 1 : index
    %c0_30 = arith.constant 0 : index
    %c0_31 = arith.constant 0 : index
    %70 = vector.load %arg2[%c1_28, %c1_29, %c0_30, %c0_31] : memref<6x4x8x64xf32, #tpu.memory_space<vmem>>, vector<1x1x8x64xf32>
    %71 = vector.shape_cast %70 : vector<1x1x8x64xf32> to vector<8x64xf32>
    %c1_32 = arith.constant 1 : index
    %c2_33 = arith.constant 2 : index
    %c0_34 = arith.constant 0 : index
    %c0_35 = arith.constant 0 : index
    %72 = vector.load %arg2[%c1_32, %c2_33, %c0_34, %c0_35] : memref<6x4x8x64xf32, #tpu.memory_space<vmem>>, vector<1x1x8x64xf32>
    %73 = vector.shape_cast %72 : vector<1x1x8x64xf32> to vector<8x64xf32>
    %c1_36 = arith.constant 1 : index
    %c3_37 = arith.constant 3 : index
    %c0_38 = arith.constant 0 : index
    %c0_39 = arith.constant 0 : index
    %74 = vector.load %arg2[%c1_36, %c3_37, %c0_38, %c0_39] : memref<6x4x8x64xf32, #tpu.memory_space<vmem>>, vector<1x1x8x64xf32>
    %75 = vector.shape_cast %74 : vector<1x1x8x64xf32> to vector<8x64xf32>
    %76 = vector.extract_strided_slice %7 {offsets = [4, 0], sizes = [4, 64], strides = [1, 1]} : vector<24x128xf32> to vector<4x64xf32>
    %77 = vector.extract_strided_slice %76 {offsets = [0, 0], sizes = [1, 64], strides = [1, 1]} : vector<4x64xf32> to vector<1x64xf32>
    %78 = vector.broadcast %77 : vector<1x64xf32> to vector<8x64xf32>
    %79 = arith.mulf %78, %69 : vector<8x64xf32>
    %80 = vector.extract_strided_slice %76 {offsets = [1, 0], sizes = [1, 64], strides = [1, 1]} : vector<4x64xf32> to vector<1x64xf32>
    %81 = vector.broadcast %80 : vector<1x64xf32> to vector<8x64xf32>
    %82 = arith.mulf %81, %71 : vector<8x64xf32>
    %83 = arith.addf %79, %82 : vector<8x64xf32>
    %84 = vector.extract_strided_slice %76 {offsets = [2, 0], sizes = [1, 64], strides = [1, 1]} : vector<4x64xf32> to vector<1x64xf32>
    %85 = vector.broadcast %84 : vector<1x64xf32> to vector<8x64xf32>
    %86 = arith.mulf %85, %73 : vector<8x64xf32>
    %87 = arith.addf %83, %86 : vector<8x64xf32>
    %88 = vector.extract_strided_slice %76 {offsets = [3, 0], sizes = [1, 64], strides = [1, 1]} : vector<4x64xf32> to vector<1x64xf32>
    %89 = vector.broadcast %88 : vector<1x64xf32> to vector<8x64xf32>
    %90 = arith.mulf %89, %75 : vector<8x64xf32>
    %91 = arith.addf %87, %90 : vector<8x64xf32>
    %cst_40 = arith.constant dense<0.000000e+00> : vector<8xf32>
    %92 = vector.multi_reduction <add>, %91, %cst_40 [1] : vector<8x64xf32> to vector<8xf32>
    %93 = vector.shape_cast %92 : vector<8xf32> to vector<8x1xf32>
    %c2_i32 = arith.constant 2 : i32
    %94 = vector.broadcast %c2_i32 : i32 to vector<8x12xi32>
    %95 = arith.cmpi eq, %8, %94 : vector<8x12xi32>
    %cst_41 = arith.constant 0.000000e+00 : f32
    %96 = vector.shape_cast %93 : vector<8x1xf32> to vector<8x1xf32>
    %97 = vector.broadcast %96 : vector<8x1xf32> to vector<8x12xf32>
    %98 = vector.broadcast %cst_41 : f32 to vector<8x12xf32>
    %99 = arith.select %95, %97, %98 : vector<8x12xi1>, vector<8x12xf32>
    %100 = arith.addf %67, %99 : vector<8x12xf32>
    %101 = vector.extract_strided_slice %7 {offsets = [4, 64], sizes = [4, 64], strides = [1, 1]} : vector<24x128xf32> to vector<4x64xf32>
    %102 = vector.extract_strided_slice %101 {offsets = [0, 0], sizes = [1, 64], strides = [1, 1]} : vector<4x64xf32> to vector<1x64xf32>
    %103 = vector.broadcast %102 : vector<1x64xf32> to vector<8x64xf32>
    %104 = arith.mulf %103, %69 : vector<8x64xf32>
    %105 = vector.extract_strided_slice %101 {offsets = [1, 0], sizes = [1, 64], strides = [1, 1]} : vector<4x64xf32> to vector<1x64xf32>
    %106 = vector.broadcast %105 : vector<1x64xf32> to vector<8x64xf32>
    %107 = arith.mulf %106, %71 : vector<8x64xf32>
    %108 = arith.addf %104, %107 : vector<8x64xf32>
    %109 = vector.extract_strided_slice %101 {offsets = [2, 0], sizes = [1, 64], strides = [1, 1]} : vector<4x64xf32> to vector<1x64xf32>
    %110 = vector.broadcast %109 : vector<1x64xf32> to vector<8x64xf32>
    %111 = arith.mulf %110, %73 : vector<8x64xf32>
    %112 = arith.addf %108, %111 : vector<8x64xf32>
    %113 = vector.extract_strided_slice %101 {offsets = [3, 0], sizes = [1, 64], strides = [1, 1]} : vector<4x64xf32> to vector<1x64xf32>
    %114 = vector.broadcast %113 : vector<1x64xf32> to vector<8x64xf32>
    %115 = arith.mulf %114, %75 : vector<8x64xf32>
    %116 = arith.addf %112, %115 : vector<8x64xf32>
    %cst_42 = arith.constant dense<0.000000e+00> : vector<8xf32>
    %117 = vector.multi_reduction <add>, %116, %cst_42 [1] : vector<8x64xf32> to vector<8xf32>
    %118 = vector.shape_cast %117 : vector<8xf32> to vector<8x1xf32>
    %c3_i32 = arith.constant 3 : i32
    %119 = vector.broadcast %c3_i32 : i32 to vector<8x12xi32>
    %120 = arith.cmpi eq, %8, %119 : vector<8x12xi32>
    %cst_43 = arith.constant 0.000000e+00 : f32
    %121 = vector.shape_cast %118 : vector<8x1xf32> to vector<8x1xf32>
    %122 = vector.broadcast %121 : vector<8x1xf32> to vector<8x12xf32>
    %123 = vector.broadcast %cst_43 : f32 to vector<8x12xf32>
    %124 = arith.select %120, %122, %123 : vector<8x12xi1>, vector<8x12xf32>
    %125 = arith.addf %100, %124 : vector<8x12xf32>
    %c2_44 = arith.constant 2 : index
    %c0_45 = arith.constant 0 : index
    %c0_46 = arith.constant 0 : index
    %c0_47 = arith.constant 0 : index
    %126 = vector.load %arg2[%c2_44, %c0_45, %c0_46, %c0_47] : memref<6x4x8x64xf32, #tpu.memory_space<vmem>>, vector<1x1x8x64xf32>
    %127 = vector.shape_cast %126 : vector<1x1x8x64xf32> to vector<8x64xf32>
    %c2_48 = arith.constant 2 : index
    %c1_49 = arith.constant 1 : index
    %c0_50 = arith.constant 0 : index
    %c0_51 = arith.constant 0 : index
    %128 = vector.load %arg2[%c2_48, %c1_49, %c0_50, %c0_51] : memref<6x4x8x64xf32, #tpu.memory_space<vmem>>, vector<1x1x8x64xf32>
    %129 = vector.shape_cast %128 : vector<1x1x8x64xf32> to vector<8x64xf32>
    %c2_52 = arith.constant 2 : index
    %c2_53 = arith.constant 2 : index
    %c0_54 = arith.constant 0 : index
    %c0_55 = arith.constant 0 : index
    %130 = vector.load %arg2[%c2_52, %c2_53, %c0_54, %c0_55] : memref<6x4x8x64xf32, #tpu.memory_space<vmem>>, vector<1x1x8x64xf32>
    %131 = vector.shape_cast %130 : vector<1x1x8x64xf32> to vector<8x64xf32>
    %c2_56 = arith.constant 2 : index
    %c3_57 = arith.constant 3 : index
    %c0_58 = arith.constant 0 : index
    %c0_59 = arith.constant 0 : index
    %132 = vector.load %arg2[%c2_56, %c3_57, %c0_58, %c0_59] : memref<6x4x8x64xf32, #tpu.memory_space<vmem>>, vector<1x1x8x64xf32>
    %133 = vector.shape_cast %132 : vector<1x1x8x64xf32> to vector<8x64xf32>
    %134 = vector.extract_strided_slice %7 {offsets = [8, 0], sizes = [4, 64], strides = [1, 1]} : vector<24x128xf32> to vector<4x64xf32>
    %135 = vector.extract_strided_slice %134 {offsets = [0, 0], sizes = [1, 64], strides = [1, 1]} : vector<4x64xf32> to vector<1x64xf32>
    %136 = vector.broadcast %135 : vector<1x64xf32> to vector<8x64xf32>
    %137 = arith.mulf %136, %127 : vector<8x64xf32>
    %138 = vector.extract_strided_slice %134 {offsets = [1, 0], sizes = [1, 64], strides = [1, 1]} : vector<4x64xf32> to vector<1x64xf32>
    %139 = vector.broadcast %138 : vector<1x64xf32> to vector<8x64xf32>
    %140 = arith.mulf %139, %129 : vector<8x64xf32>
    %141 = arith.addf %137, %140 : vector<8x64xf32>
    %142 = vector.extract_strided_slice %134 {offsets = [2, 0], sizes = [1, 64], strides = [1, 1]} : vector<4x64xf32> to vector<1x64xf32>
    %143 = vector.broadcast %142 : vector<1x64xf32> to vector<8x64xf32>
    %144 = arith.mulf %143, %131 : vector<8x64xf32>
    %145 = arith.addf %141, %144 : vector<8x64xf32>
    %146 = vector.extract_strided_slice %134 {offsets = [3, 0], sizes = [1, 64], strides = [1, 1]} : vector<4x64xf32> to vector<1x64xf32>
    %147 = vector.broadcast %146 : vector<1x64xf32> to vector<8x64xf32>
    %148 = arith.mulf %147, %133 : vector<8x64xf32>
    %149 = arith.addf %145, %148 : vector<8x64xf32>
    %cst_60 = arith.constant dense<0.000000e+00> : vector<8xf32>
    %150 = vector.multi_reduction <add>, %149, %cst_60 [1] : vector<8x64xf32> to vector<8xf32>
    %151 = vector.shape_cast %150 : vector<8xf32> to vector<8x1xf32>
    %c4_i32 = arith.constant 4 : i32
    %152 = vector.broadcast %c4_i32 : i32 to vector<8x12xi32>
    %153 = arith.cmpi eq, %8, %152 : vector<8x12xi32>
    %cst_61 = arith.constant 0.000000e+00 : f32
    %154 = vector.shape_cast %151 : vector<8x1xf32> to vector<8x1xf32>
    %155 = vector.broadcast %154 : vector<8x1xf32> to vector<8x12xf32>
    %156 = vector.broadcast %cst_61 : f32 to vector<8x12xf32>
    %157 = arith.select %153, %155, %156 : vector<8x12xi1>, vector<8x12xf32>
    %158 = arith.addf %125, %157 : vector<8x12xf32>
    %159 = vector.extract_strided_slice %7 {offsets = [8, 64], sizes = [4, 64], strides = [1, 1]} : vector<24x128xf32> to vector<4x64xf32>
    %160 = vector.extract_strided_slice %159 {offsets = [0, 0], sizes = [1, 64], strides = [1, 1]} : vector<4x64xf32> to vector<1x64xf32>
    %161 = vector.broadcast %160 : vector<1x64xf32> to vector<8x64xf32>
    %162 = arith.mulf %161, %127 : vector<8x64xf32>
    %163 = vector.extract_strided_slice %159 {offsets = [1, 0], sizes = [1, 64], strides = [1, 1]} : vector<4x64xf32> to vector<1x64xf32>
    %164 = vector.broadcast %163 : vector<1x64xf32> to vector<8x64xf32>
    %165 = arith.mulf %164, %129 : vector<8x64xf32>
    %166 = arith.addf %162, %165 : vector<8x64xf32>
    %167 = vector.extract_strided_slice %159 {offsets = [2, 0], sizes = [1, 64], strides = [1, 1]} : vector<4x64xf32> to vector<1x64xf32>
    %168 = vector.broadcast %167 : vector<1x64xf32> to vector<8x64xf32>
    %169 = arith.mulf %168, %131 : vector<8x64xf32>
    %170 = arith.addf %166, %169 : vector<8x64xf32>
    %171 = vector.extract_strided_slice %159 {offsets = [3, 0], sizes = [1, 64], strides = [1, 1]} : vector<4x64xf32> to vector<1x64xf32>
    %172 = vector.broadcast %171 : vector<1x64xf32> to vector<8x64xf32>
    %173 = arith.mulf %172, %133 : vector<8x64xf32>
    %174 = arith.addf %170, %173 : vector<8x64xf32>
    %cst_62 = arith.constant dense<0.000000e+00> : vector<8xf32>
    %175 = vector.multi_reduction <add>, %174, %cst_62 [1] : vector<8x64xf32> to vector<8xf32>
    %176 = vector.shape_cast %175 : vector<8xf32> to vector<8x1xf32>
    %c5_i32 = arith.constant 5 : i32
    %177 = vector.broadcast %c5_i32 : i32 to vector<8x12xi32>
    %178 = arith.cmpi eq, %8, %177 : vector<8x12xi32>
    %cst_63 = arith.constant 0.000000e+00 : f32
    %179 = vector.shape_cast %176 : vector<8x1xf32> to vector<8x1xf32>
    %180 = vector.broadcast %179 : vector<8x1xf32> to vector<8x12xf32>
    %181 = vector.broadcast %cst_63 : f32 to vector<8x12xf32>
    %182 = arith.select %178, %180, %181 : vector<8x12xi1>, vector<8x12xf32>
    %183 = arith.addf %158, %182 : vector<8x12xf32>
    %c3_64 = arith.constant 3 : index
    %c0_65 = arith.constant 0 : index
    %c0_66 = arith.constant 0 : index
    %c0_67 = arith.constant 0 : index
    %184 = vector.load %arg2[%c3_64, %c0_65, %c0_66, %c0_67] : memref<6x4x8x64xf32, #tpu.memory_space<vmem>>, vector<1x1x8x64xf32>
    %185 = vector.shape_cast %184 : vector<1x1x8x64xf32> to vector<8x64xf32>
    %c3_68 = arith.constant 3 : index
    %c1_69 = arith.constant 1 : index
    %c0_70 = arith.constant 0 : index
    %c0_71 = arith.constant 0 : index
    %186 = vector.load %arg2[%c3_68, %c1_69, %c0_70, %c0_71] : memref<6x4x8x64xf32, #tpu.memory_space<vmem>>, vector<1x1x8x64xf32>
    %187 = vector.shape_cast %186 : vector<1x1x8x64xf32> to vector<8x64xf32>
    %c3_72 = arith.constant 3 : index
    %c2_73 = arith.constant 2 : index
    %c0_74 = arith.constant 0 : index
    %c0_75 = arith.constant 0 : index
    %188 = vector.load %arg2[%c3_72, %c2_73, %c0_74, %c0_75] : memref<6x4x8x64xf32, #tpu.memory_space<vmem>>, vector<1x1x8x64xf32>
    %189 = vector.shape_cast %188 : vector<1x1x8x64xf32> to vector<8x64xf32>
    %c3_76 = arith.constant 3 : index
    %c3_77 = arith.constant 3 : index
    %c0_78 = arith.constant 0 : index
    %c0_79 = arith.constant 0 : index
    %190 = vector.load %arg2[%c3_76, %c3_77, %c0_78, %c0_79] : memref<6x4x8x64xf32, #tpu.memory_space<vmem>>, vector<1x1x8x64xf32>
    %191 = vector.shape_cast %190 : vector<1x1x8x64xf32> to vector<8x64xf32>
    %192 = vector.extract_strided_slice %7 {offsets = [12, 0], sizes = [4, 64], strides = [1, 1]} : vector<24x128xf32> to vector<4x64xf32>
    %193 = vector.extract_strided_slice %192 {offsets = [0, 0], sizes = [1, 64], strides = [1, 1]} : vector<4x64xf32> to vector<1x64xf32>
    %194 = vector.broadcast %193 : vector<1x64xf32> to vector<8x64xf32>
    %195 = arith.mulf %194, %185 : vector<8x64xf32>
    %196 = vector.extract_strided_slice %192 {offsets = [1, 0], sizes = [1, 64], strides = [1, 1]} : vector<4x64xf32> to vector<1x64xf32>
    %197 = vector.broadcast %196 : vector<1x64xf32> to vector<8x64xf32>
    %198 = arith.mulf %197, %187 : vector<8x64xf32>
    %199 = arith.addf %195, %198 : vector<8x64xf32>
    %200 = vector.extract_strided_slice %192 {offsets = [2, 0], sizes = [1, 64], strides = [1, 1]} : vector<4x64xf32> to vector<1x64xf32>
    %201 = vector.broadcast %200 : vector<1x64xf32> to vector<8x64xf32>
    %202 = arith.mulf %201, %189 : vector<8x64xf32>
    %203 = arith.addf %199, %202 : vector<8x64xf32>
    %204 = vector.extract_strided_slice %192 {offsets = [3, 0], sizes = [1, 64], strides = [1, 1]} : vector<4x64xf32> to vector<1x64xf32>
    %205 = vector.broadcast %204 : vector<1x64xf32> to vector<8x64xf32>
    %206 = arith.mulf %205, %191 : vector<8x64xf32>
    %207 = arith.addf %203, %206 : vector<8x64xf32>
    %cst_80 = arith.constant dense<0.000000e+00> : vector<8xf32>
    %208 = vector.multi_reduction <add>, %207, %cst_80 [1] : vector<8x64xf32> to vector<8xf32>
    %209 = vector.shape_cast %208 : vector<8xf32> to vector<8x1xf32>
    %c6_i32 = arith.constant 6 : i32
    %210 = vector.broadcast %c6_i32 : i32 to vector<8x12xi32>
    %211 = arith.cmpi eq, %8, %210 : vector<8x12xi32>
    %cst_81 = arith.constant 0.000000e+00 : f32
    %212 = vector.shape_cast %209 : vector<8x1xf32> to vector<8x1xf32>
    %213 = vector.broadcast %212 : vector<8x1xf32> to vector<8x12xf32>
    %214 = vector.broadcast %cst_81 : f32 to vector<8x12xf32>
    %215 = arith.select %211, %213, %214 : vector<8x12xi1>, vector<8x12xf32>
    %216 = arith.addf %183, %215 : vector<8x12xf32>
    %217 = vector.extract_strided_slice %7 {offsets = [12, 64], sizes = [4, 64], strides = [1, 1]} : vector<24x128xf32> to vector<4x64xf32>
    %218 = vector.extract_strided_slice %217 {offsets = [0, 0], sizes = [1, 64], strides = [1, 1]} : vector<4x64xf32> to vector<1x64xf32>
    %219 = vector.broadcast %218 : vector<1x64xf32> to vector<8x64xf32>
    %220 = arith.mulf %219, %185 : vector<8x64xf32>
    %221 = vector.extract_strided_slice %217 {offsets = [1, 0], sizes = [1, 64], strides = [1, 1]} : vector<4x64xf32> to vector<1x64xf32>
    %222 = vector.broadcast %221 : vector<1x64xf32> to vector<8x64xf32>
    %223 = arith.mulf %222, %187 : vector<8x64xf32>
    %224 = arith.addf %220, %223 : vector<8x64xf32>
    %225 = vector.extract_strided_slice %217 {offsets = [2, 0], sizes = [1, 64], strides = [1, 1]} : vector<4x64xf32> to vector<1x64xf32>
    %226 = vector.broadcast %225 : vector<1x64xf32> to vector<8x64xf32>
    %227 = arith.mulf %226, %189 : vector<8x64xf32>
    %228 = arith.addf %224, %227 : vector<8x64xf32>
    %229 = vector.extract_strided_slice %217 {offsets = [3, 0], sizes = [1, 64], strides = [1, 1]} : vector<4x64xf32> to vector<1x64xf32>
    %230 = vector.broadcast %229 : vector<1x64xf32> to vector<8x64xf32>
    %231 = arith.mulf %230, %191 : vector<8x64xf32>
    %232 = arith.addf %228, %231 : vector<8x64xf32>
    %cst_82 = arith.constant dense<0.000000e+00> : vector<8xf32>
    %233 = vector.multi_reduction <add>, %232, %cst_82 [1] : vector<8x64xf32> to vector<8xf32>
    %234 = vector.shape_cast %233 : vector<8xf32> to vector<8x1xf32>
    %c7_i32 = arith.constant 7 : i32
    %235 = vector.broadcast %c7_i32 : i32 to vector<8x12xi32>
    %236 = arith.cmpi eq, %8, %235 : vector<8x12xi32>
    %cst_83 = arith.constant 0.000000e+00 : f32
    %237 = vector.shape_cast %234 : vector<8x1xf32> to vector<8x1xf32>
    %238 = vector.broadcast %237 : vector<8x1xf32> to vector<8x12xf32>
    %239 = vector.broadcast %cst_83 : f32 to vector<8x12xf32>
    %240 = arith.select %236, %238, %239 : vector<8x12xi1>, vector<8x12xf32>
    %241 = arith.addf %216, %240 : vector<8x12xf32>
    %c4 = arith.constant 4 : index
    %c0_84 = arith.constant 0 : index
    %c0_85 = arith.constant 0 : index
    %c0_86 = arith.constant 0 : index
    %242 = vector.load %arg2[%c4, %c0_84, %c0_85, %c0_86] : memref<6x4x8x64xf32, #tpu.memory_space<vmem>>, vector<1x1x8x64xf32>
    %243 = vector.shape_cast %242 : vector<1x1x8x64xf32> to vector<8x64xf32>
    %c4_87 = arith.constant 4 : index
    %c1_88 = arith.constant 1 : index
    %c0_89 = arith.constant 0 : index
    %c0_90 = arith.constant 0 : index
    %244 = vector.load %arg2[%c4_87, %c1_88, %c0_89, %c0_90] : memref<6x4x8x64xf32, #tpu.memory_space<vmem>>, vector<1x1x8x64xf32>
    %245 = vector.shape_cast %244 : vector<1x1x8x64xf32> to vector<8x64xf32>
    %c4_91 = arith.constant 4 : index
    %c2_92 = arith.constant 2 : index
    %c0_93 = arith.constant 0 : index
    %c0_94 = arith.constant 0 : index
    %246 = vector.load %arg2[%c4_91, %c2_92, %c0_93, %c0_94] : memref<6x4x8x64xf32, #tpu.memory_space<vmem>>, vector<1x1x8x64xf32>
    %247 = vector.shape_cast %246 : vector<1x1x8x64xf32> to vector<8x64xf32>
    %c4_95 = arith.constant 4 : index
    %c3_96 = arith.constant 3 : index
    %c0_97 = arith.constant 0 : index
    %c0_98 = arith.constant 0 : index
    %248 = vector.load %arg2[%c4_95, %c3_96, %c0_97, %c0_98] : memref<6x4x8x64xf32, #tpu.memory_space<vmem>>, vector<1x1x8x64xf32>
    %249 = vector.shape_cast %248 : vector<1x1x8x64xf32> to vector<8x64xf32>
    %250 = vector.extract_strided_slice %7 {offsets = [16, 0], sizes = [4, 64], strides = [1, 1]} : vector<24x128xf32> to vector<4x64xf32>
    %251 = vector.extract_strided_slice %250 {offsets = [0, 0], sizes = [1, 64], strides = [1, 1]} : vector<4x64xf32> to vector<1x64xf32>
    %252 = vector.broadcast %251 : vector<1x64xf32> to vector<8x64xf32>
    %253 = arith.mulf %252, %243 : vector<8x64xf32>
    %254 = vector.extract_strided_slice %250 {offsets = [1, 0], sizes = [1, 64], strides = [1, 1]} : vector<4x64xf32> to vector<1x64xf32>
    %255 = vector.broadcast %254 : vector<1x64xf32> to vector<8x64xf32>
    %256 = arith.mulf %255, %245 : vector<8x64xf32>
    %257 = arith.addf %253, %256 : vector<8x64xf32>
    %258 = vector.extract_strided_slice %250 {offsets = [2, 0], sizes = [1, 64], strides = [1, 1]} : vector<4x64xf32> to vector<1x64xf32>
    %259 = vector.broadcast %258 : vector<1x64xf32> to vector<8x64xf32>
    %260 = arith.mulf %259, %247 : vector<8x64xf32>
    %261 = arith.addf %257, %260 : vector<8x64xf32>
    %262 = vector.extract_strided_slice %250 {offsets = [3, 0], sizes = [1, 64], strides = [1, 1]} : vector<4x64xf32> to vector<1x64xf32>
    %263 = vector.broadcast %262 : vector<1x64xf32> to vector<8x64xf32>
    %264 = arith.mulf %263, %249 : vector<8x64xf32>
    %265 = arith.addf %261, %264 : vector<8x64xf32>
    %cst_99 = arith.constant dense<0.000000e+00> : vector<8xf32>
    %266 = vector.multi_reduction <add>, %265, %cst_99 [1] : vector<8x64xf32> to vector<8xf32>
    %267 = vector.shape_cast %266 : vector<8xf32> to vector<8x1xf32>
    %c8_i32 = arith.constant 8 : i32
    %268 = vector.broadcast %c8_i32 : i32 to vector<8x12xi32>
    %269 = arith.cmpi eq, %8, %268 : vector<8x12xi32>
    %cst_100 = arith.constant 0.000000e+00 : f32
    %270 = vector.shape_cast %267 : vector<8x1xf32> to vector<8x1xf32>
    %271 = vector.broadcast %270 : vector<8x1xf32> to vector<8x12xf32>
    %272 = vector.broadcast %cst_100 : f32 to vector<8x12xf32>
    %273 = arith.select %269, %271, %272 : vector<8x12xi1>, vector<8x12xf32>
    %274 = arith.addf %241, %273 : vector<8x12xf32>
    %275 = vector.extract_strided_slice %7 {offsets = [16, 64], sizes = [4, 64], strides = [1, 1]} : vector<24x128xf32> to vector<4x64xf32>
    %276 = vector.extract_strided_slice %275 {offsets = [0, 0], sizes = [1, 64], strides = [1, 1]} : vector<4x64xf32> to vector<1x64xf32>
    %277 = vector.broadcast %276 : vector<1x64xf32> to vector<8x64xf32>
    %278 = arith.mulf %277, %243 : vector<8x64xf32>
    %279 = vector.extract_strided_slice %275 {offsets = [1, 0], sizes = [1, 64], strides = [1, 1]} : vector<4x64xf32> to vector<1x64xf32>
    %280 = vector.broadcast %279 : vector<1x64xf32> to vector<8x64xf32>
    %281 = arith.mulf %280, %245 : vector<8x64xf32>
    %282 = arith.addf %278, %281 : vector<8x64xf32>
    %283 = vector.extract_strided_slice %275 {offsets = [2, 0], sizes = [1, 64], strides = [1, 1]} : vector<4x64xf32> to vector<1x64xf32>
    %284 = vector.broadcast %283 : vector<1x64xf32> to vector<8x64xf32>
    %285 = arith.mulf %284, %247 : vector<8x64xf32>
    %286 = arith.addf %282, %285 : vector<8x64xf32>
    %287 = vector.extract_strided_slice %275 {offsets = [3, 0], sizes = [1, 64], strides = [1, 1]} : vector<4x64xf32> to vector<1x64xf32>
    %288 = vector.broadcast %287 : vector<1x64xf32> to vector<8x64xf32>
    %289 = arith.mulf %288, %249 : vector<8x64xf32>
    %290 = arith.addf %286, %289 : vector<8x64xf32>
    %cst_101 = arith.constant dense<0.000000e+00> : vector<8xf32>
    %291 = vector.multi_reduction <add>, %290, %cst_101 [1] : vector<8x64xf32> to vector<8xf32>
    %292 = vector.shape_cast %291 : vector<8xf32> to vector<8x1xf32>
    %c9_i32 = arith.constant 9 : i32
    %293 = vector.broadcast %c9_i32 : i32 to vector<8x12xi32>
    %294 = arith.cmpi eq, %8, %293 : vector<8x12xi32>
    %cst_102 = arith.constant 0.000000e+00 : f32
    %295 = vector.shape_cast %292 : vector<8x1xf32> to vector<8x1xf32>
    %296 = vector.broadcast %295 : vector<8x1xf32> to vector<8x12xf32>
    %297 = vector.broadcast %cst_102 : f32 to vector<8x12xf32>
    %298 = arith.select %294, %296, %297 : vector<8x12xi1>, vector<8x12xf32>
    %299 = arith.addf %274, %298 : vector<8x12xf32>
    %c5 = arith.constant 5 : index
    %c0_103 = arith.constant 0 : index
    %c0_104 = arith.constant 0 : index
    %c0_105 = arith.constant 0 : index
    %300 = vector.load %arg2[%c5, %c0_103, %c0_104, %c0_105] : memref<6x4x8x64xf32, #tpu.memory_space<vmem>>, vector<1x1x8x64xf32>
    %301 = vector.shape_cast %300 : vector<1x1x8x64xf32> to vector<8x64xf32>
    %c5_106 = arith.constant 5 : index
    %c1_107 = arith.constant 1 : index
    %c0_108 = arith.constant 0 : index
    %c0_109 = arith.constant 0 : index
    %302 = vector.load %arg2[%c5_106, %c1_107, %c0_108, %c0_109] : memref<6x4x8x64xf32, #tpu.memory_space<vmem>>, vector<1x1x8x64xf32>
    %303 = vector.shape_cast %302 : vector<1x1x8x64xf32> to vector<8x64xf32>
    %c5_110 = arith.constant 5 : index
    %c2_111 = arith.constant 2 : index
    %c0_112 = arith.constant 0 : index
    %c0_113 = arith.constant 0 : index
    %304 = vector.load %arg2[%c5_110, %c2_111, %c0_112, %c0_113] : memref<6x4x8x64xf32, #tpu.memory_space<vmem>>, vector<1x1x8x64xf32>
    %305 = vector.shape_cast %304 : vector<1x1x8x64xf32> to vector<8x64xf32>
    %c5_114 = arith.constant 5 : index
    %c3_115 = arith.constant 3 : index
    %c0_116 = arith.constant 0 : index
    %c0_117 = arith.constant 0 : index
    %306 = vector.load %arg2[%c5_114, %c3_115, %c0_116, %c0_117] : memref<6x4x8x64xf32, #tpu.memory_space<vmem>>, vector<1x1x8x64xf32>
    %307 = vector.shape_cast %306 : vector<1x1x8x64xf32> to vector<8x64xf32>
    %308 = vector.extract_strided_slice %7 {offsets = [20, 0], sizes = [4, 64], strides = [1, 1]} : vector<24x128xf32> to vector<4x64xf32>
    %309 = vector.extract_strided_slice %308 {offsets = [0, 0], sizes = [1, 64], strides = [1, 1]} : vector<4x64xf32> to vector<1x64xf32>
    %310 = vector.broadcast %309 : vector<1x64xf32> to vector<8x64xf32>
    %311 = arith.mulf %310, %301 : vector<8x64xf32>
    %312 = vector.extract_strided_slice %308 {offsets = [1, 0], sizes = [1, 64], strides = [1, 1]} : vector<4x64xf32> to vector<1x64xf32>
    %313 = vector.broadcast %312 : vector<1x64xf32> to vector<8x64xf32>
    %314 = arith.mulf %313, %303 : vector<8x64xf32>
    %315 = arith.addf %311, %314 : vector<8x64xf32>
    %316 = vector.extract_strided_slice %308 {offsets = [2, 0], sizes = [1, 64], strides = [1, 1]} : vector<4x64xf32> to vector<1x64xf32>
    %317 = vector.broadcast %316 : vector<1x64xf32> to vector<8x64xf32>
    %318 = arith.mulf %317, %305 : vector<8x64xf32>
    %319 = arith.addf %315, %318 : vector<8x64xf32>
    %320 = vector.extract_strided_slice %308 {offsets = [3, 0], sizes = [1, 64], strides = [1, 1]} : vector<4x64xf32> to vector<1x64xf32>
    %321 = vector.broadcast %320 : vector<1x64xf32> to vector<8x64xf32>
    %322 = arith.mulf %321, %307 : vector<8x64xf32>
    %323 = arith.addf %319, %322 : vector<8x64xf32>
    %cst_118 = arith.constant dense<0.000000e+00> : vector<8xf32>
    %324 = vector.multi_reduction <add>, %323, %cst_118 [1] : vector<8x64xf32> to vector<8xf32>
    %325 = vector.shape_cast %324 : vector<8xf32> to vector<8x1xf32>
    %c10_i32 = arith.constant 10 : i32
    %326 = vector.broadcast %c10_i32 : i32 to vector<8x12xi32>
    %327 = arith.cmpi eq, %8, %326 : vector<8x12xi32>
    %cst_119 = arith.constant 0.000000e+00 : f32
    %328 = vector.shape_cast %325 : vector<8x1xf32> to vector<8x1xf32>
    %329 = vector.broadcast %328 : vector<8x1xf32> to vector<8x12xf32>
    %330 = vector.broadcast %cst_119 : f32 to vector<8x12xf32>
    %331 = arith.select %327, %329, %330 : vector<8x12xi1>, vector<8x12xf32>
    %332 = arith.addf %299, %331 : vector<8x12xf32>
    %333 = vector.extract_strided_slice %7 {offsets = [20, 64], sizes = [4, 64], strides = [1, 1]} : vector<24x128xf32> to vector<4x64xf32>
    %334 = vector.extract_strided_slice %333 {offsets = [0, 0], sizes = [1, 64], strides = [1, 1]} : vector<4x64xf32> to vector<1x64xf32>
    %335 = vector.broadcast %334 : vector<1x64xf32> to vector<8x64xf32>
    %336 = arith.mulf %335, %301 : vector<8x64xf32>
    %337 = vector.extract_strided_slice %333 {offsets = [1, 0], sizes = [1, 64], strides = [1, 1]} : vector<4x64xf32> to vector<1x64xf32>
    %338 = vector.broadcast %337 : vector<1x64xf32> to vector<8x64xf32>
    %339 = arith.mulf %338, %303 : vector<8x64xf32>
    %340 = arith.addf %336, %339 : vector<8x64xf32>
    %341 = vector.extract_strided_slice %333 {offsets = [2, 0], sizes = [1, 64], strides = [1, 1]} : vector<4x64xf32> to vector<1x64xf32>
    %342 = vector.broadcast %341 : vector<1x64xf32> to vector<8x64xf32>
    %343 = arith.mulf %342, %305 : vector<8x64xf32>
    %344 = arith.addf %340, %343 : vector<8x64xf32>
    %345 = vector.extract_strided_slice %333 {offsets = [3, 0], sizes = [1, 64], strides = [1, 1]} : vector<4x64xf32> to vector<1x64xf32>
    %346 = vector.broadcast %345 : vector<1x64xf32> to vector<8x64xf32>
    %347 = arith.mulf %346, %307 : vector<8x64xf32>
    %348 = arith.addf %344, %347 : vector<8x64xf32>
    %cst_120 = arith.constant dense<0.000000e+00> : vector<8xf32>
    %349 = vector.multi_reduction <add>, %348, %cst_120 [1] : vector<8x64xf32> to vector<8xf32>
    %350 = vector.shape_cast %349 : vector<8xf32> to vector<8x1xf32>
    %c11_i32 = arith.constant 11 : i32
    %351 = vector.broadcast %c11_i32 : i32 to vector<8x12xi32>
    %352 = arith.cmpi eq, %8, %351 : vector<8x12xi32>
    %cst_121 = arith.constant 0.000000e+00 : f32
    %353 = vector.shape_cast %350 : vector<8x1xf32> to vector<8x1xf32>
    %354 = vector.broadcast %353 : vector<8x1xf32> to vector<8x12xf32>
    %355 = vector.broadcast %cst_121 : f32 to vector<8x12xf32>
    %356 = arith.select %352, %354, %355 : vector<8x12xi1>, vector<8x12xf32>
    %357 = arith.addf %332, %356 : vector<8x12xf32>
    %358 = vector.extract_strided_slice %357 {offsets = [0, 0], sizes = [4, 12], strides = [1, 1]} : vector<8x12xf32> to vector<4x12xf32>
    %359 = math.tanh %358 : vector<4x12xf32>
    %360 = vector.extract_strided_slice %357 {offsets = [4, 0], sizes = [4, 12], strides = [1, 1]} : vector<8x12xf32> to vector<4x12xf32>
    %361 = math.tanh %360 : vector<4x12xf32>
    %362 = vector.extract_strided_slice %359 {offsets = [0, 0], sizes = [4, 6], strides = [1, 1]} : vector<4x12xf32> to vector<4x6xf32>
    %363 = vector.extract_strided_slice %359 {offsets = [0, 6], sizes = [4, 6], strides = [1, 1]} : vector<4x12xf32> to vector<4x6xf32>
    %364 = vector.extract_strided_slice %361 {offsets = [0, 0], sizes = [4, 6], strides = [1, 1]} : vector<4x12xf32> to vector<4x6xf32>
    %365 = vector.extract_strided_slice %361 {offsets = [0, 6], sizes = [4, 6], strides = [1, 1]} : vector<4x12xf32> to vector<4x6xf32>
    %c0_122 = arith.constant 0 : index
    %c0_123 = arith.constant 0 : index
    %c0_124 = arith.constant 0 : index
    %366 = vector.load %arg4[%c0_122, %c0_123, %c0_124] : memref<2x4x6xf32, #tpu.memory_space<vmem>>, vector<1x4x6xf32>
    %367 = vector.shape_cast %366 : vector<1x4x6xf32> to vector<4x6xf32>
    %cst_125 = arith.constant 5.000000e-01 : f32
    %368 = vector.broadcast %cst_125 : f32 to vector<4x6xf32>
    %369 = arith.mulf %368, %364 : vector<4x6xf32>
    %370 = math.exp %369 : vector<4x6xf32>
    %371 = arith.mulf %367, %370 : vector<4x6xf32>
    %372 = arith.addf %371, %362 : vector<4x6xf32>
    %c1_126 = arith.constant 1 : index
    %c0_127 = arith.constant 0 : index
    %c0_128 = arith.constant 0 : index
    %373 = vector.load %arg4[%c1_126, %c0_127, %c0_128] : memref<2x4x6xf32, #tpu.memory_space<vmem>>, vector<1x4x6xf32>
    %374 = vector.shape_cast %373 : vector<1x4x6xf32> to vector<4x6xf32>
    %cst_129 = arith.constant 5.000000e-01 : f32
    %375 = vector.broadcast %cst_129 : f32 to vector<4x6xf32>
    %376 = arith.mulf %375, %365 : vector<4x6xf32>
    %377 = math.exp %376 : vector<4x6xf32>
    %378 = arith.mulf %374, %377 : vector<4x6xf32>
    %379 = arith.addf %378, %363 : vector<4x6xf32>
    %cst_130 = arith.constant 2.000000e+00 : f32
    %380 = vector.broadcast %cst_130 : f32 to vector<4x6xf32>
    %381 = arith.mulf %380, %364 : vector<4x6xf32>
    %382 = math.exp %381 : vector<4x6xf32>
    %cst_131 = arith.constant 2.000000e+00 : f32
    %383 = vector.broadcast %cst_131 : f32 to vector<4x6xf32>
    %384 = arith.mulf %383, %365 : vector<4x6xf32>
    %385 = math.exp %384 : vector<4x6xf32>
    %386 = arith.subf %362, %363 : vector<4x6xf32>
    %387 = arith.mulf %386, %386 : vector<4x6xf32>
    %388 = arith.subf %365, %364 : vector<4x6xf32>
    %389 = arith.addf %382, %387 : vector<4x6xf32>
    %cst_132 = arith.constant 2.000000e+00 : f32
    %390 = vector.broadcast %cst_132 : f32 to vector<4x6xf32>
    %391 = arith.mulf %390, %385 : vector<4x6xf32>
    %392 = arith.divf %389, %391 : vector<4x6xf32>
    %393 = arith.addf %388, %392 : vector<4x6xf32>
    %cst_133 = arith.constant 5.000000e-01 : f32
    %394 = vector.broadcast %cst_133 : f32 to vector<4x6xf32>
    %395 = arith.subf %393, %394 : vector<4x6xf32>
    %396 = arith.subf %364, %365 : vector<4x6xf32>
    %397 = arith.addf %385, %387 : vector<4x6xf32>
    %cst_134 = arith.constant 2.000000e+00 : f32
    %398 = vector.broadcast %cst_134 : f32 to vector<4x6xf32>
    %399 = arith.mulf %398, %382 : vector<4x6xf32>
    %400 = arith.divf %397, %399 : vector<4x6xf32>
    %401 = arith.addf %396, %400 : vector<4x6xf32>
    %cst_135 = arith.constant 5.000000e-01 : f32
    %402 = vector.broadcast %cst_135 : f32 to vector<4x6xf32>
    %403 = arith.subf %401, %402 : vector<4x6xf32>
    %404 = arith.negf %372 : vector<4x6xf32>
    %405 = math.exp %404 : vector<4x6xf32>
    %cst_136 = arith.constant 1.000000e+00 : f32
    %406 = vector.broadcast %cst_136 : f32 to vector<4x6xf32>
    %407 = arith.addf %406, %405 : vector<4x6xf32>
    %408 = arith.divf %406, %407 : vector<4x6xf32>
    %409 = arith.negf %379 : vector<4x6xf32>
    %410 = math.exp %409 : vector<4x6xf32>
    %cst_137 = arith.constant 1.000000e+00 : f32
    %411 = vector.broadcast %cst_137 : f32 to vector<4x6xf32>
    %412 = arith.addf %411, %410 : vector<4x6xf32>
    %413 = arith.divf %411, %412 : vector<4x6xf32>
    %cst_138 = arith.constant 0.000000e+00 : f32
    %414 = vector.broadcast %cst_138 : f32 to vector<4x6xf32>
    %415 = arith.subf %414, %372 : vector<4x6xf32>
    %cst_139 = arith.constant 0.000000e+00 : f32
    %416 = vector.broadcast %cst_139 : f32 to vector<4x6xf32>
    %417 = arith.maximumf %415, %416 : vector<4x6xf32>
    %418 = math.absf %415 : vector<4x6xf32>
    %cst_140 = arith.constant 0.000000e+00 : f32
    %419 = vector.broadcast %cst_140 : f32 to vector<4x6xf32>
    %420 = arith.subf %419, %418 : vector<4x6xf32>
    %421 = math.exp %420 : vector<4x6xf32>
    %cst_141 = arith.constant 1.000000e+00 : f32
    %422 = vector.broadcast %cst_141 : f32 to vector<4x6xf32>
    %423 = arith.addf %422, %421 : vector<4x6xf32>
    %424 = math.log %423 : vector<4x6xf32>
    %425 = arith.addf %417, %424 : vector<4x6xf32>
    %cst_142 = arith.constant 0.000000e+00 : f32
    %426 = vector.broadcast %cst_142 : f32 to vector<4x6xf32>
    %427 = arith.subf %426, %425 : vector<4x6xf32>
    %cst_143 = arith.constant -1.000000e+02 : f32
    %428 = vector.broadcast %cst_143 : f32 to vector<4x6xf32>
    %429 = arith.maximumf %427, %428 : vector<4x6xf32>
    %cst_144 = arith.constant 0.000000e+00 : f32
    %430 = vector.broadcast %cst_144 : f32 to vector<4x6xf32>
    %431 = arith.maximumf %372, %430 : vector<4x6xf32>
    %432 = math.absf %372 : vector<4x6xf32>
    %cst_145 = arith.constant 0.000000e+00 : f32
    %433 = vector.broadcast %cst_145 : f32 to vector<4x6xf32>
    %434 = arith.subf %433, %432 : vector<4x6xf32>
    %435 = math.exp %434 : vector<4x6xf32>
    %cst_146 = arith.constant 1.000000e+00 : f32
    %436 = vector.broadcast %cst_146 : f32 to vector<4x6xf32>
    %437 = arith.addf %436, %435 : vector<4x6xf32>
    %438 = math.log %437 : vector<4x6xf32>
    %439 = arith.addf %431, %438 : vector<4x6xf32>
    %cst_147 = arith.constant 0.000000e+00 : f32
    %440 = vector.broadcast %cst_147 : f32 to vector<4x6xf32>
    %441 = arith.subf %440, %439 : vector<4x6xf32>
    %cst_148 = arith.constant -1.000000e+02 : f32
    %442 = vector.broadcast %cst_148 : f32 to vector<4x6xf32>
    %443 = arith.maximumf %441, %442 : vector<4x6xf32>
    %cst_149 = arith.constant 0.000000e+00 : f32
    %444 = vector.broadcast %cst_149 : f32 to vector<4x6xf32>
    %445 = arith.subf %444, %379 : vector<4x6xf32>
    %cst_150 = arith.constant 0.000000e+00 : f32
    %446 = vector.broadcast %cst_150 : f32 to vector<4x6xf32>
    %447 = arith.maximumf %445, %446 : vector<4x6xf32>
    %448 = math.absf %445 : vector<4x6xf32>
    %cst_151 = arith.constant 0.000000e+00 : f32
    %449 = vector.broadcast %cst_151 : f32 to vector<4x6xf32>
    %450 = arith.subf %449, %448 : vector<4x6xf32>
    %451 = math.exp %450 : vector<4x6xf32>
    %cst_152 = arith.constant 1.000000e+00 : f32
    %452 = vector.broadcast %cst_152 : f32 to vector<4x6xf32>
    %453 = arith.addf %452, %451 : vector<4x6xf32>
    %454 = math.log %453 : vector<4x6xf32>
    %455 = arith.addf %447, %454 : vector<4x6xf32>
    %cst_153 = arith.constant 0.000000e+00 : f32
    %456 = vector.broadcast %cst_153 : f32 to vector<4x6xf32>
    %457 = arith.subf %456, %455 : vector<4x6xf32>
    %cst_154 = arith.constant -1.000000e+02 : f32
    %458 = vector.broadcast %cst_154 : f32 to vector<4x6xf32>
    %459 = arith.maximumf %457, %458 : vector<4x6xf32>
    %cst_155 = arith.constant 0.000000e+00 : f32
    %460 = vector.broadcast %cst_155 : f32 to vector<4x6xf32>
    %461 = arith.maximumf %379, %460 : vector<4x6xf32>
    %462 = math.absf %379 : vector<4x6xf32>
    %cst_156 = arith.constant 0.000000e+00 : f32
    %463 = vector.broadcast %cst_156 : f32 to vector<4x6xf32>
    %464 = arith.subf %463, %462 : vector<4x6xf32>
    %465 = math.exp %464 : vector<4x6xf32>
    %cst_157 = arith.constant 1.000000e+00 : f32
    %466 = vector.broadcast %cst_157 : f32 to vector<4x6xf32>
    %467 = arith.addf %466, %465 : vector<4x6xf32>
    %468 = math.log %467 : vector<4x6xf32>
    %469 = arith.addf %461, %468 : vector<4x6xf32>
    %cst_158 = arith.constant 0.000000e+00 : f32
    %470 = vector.broadcast %cst_158 : f32 to vector<4x6xf32>
    %471 = arith.subf %470, %469 : vector<4x6xf32>
    %cst_159 = arith.constant -1.000000e+02 : f32
    %472 = vector.broadcast %cst_159 : f32 to vector<4x6xf32>
    %473 = arith.maximumf %471, %472 : vector<4x6xf32>
    %474 = arith.mulf %413, %429 : vector<4x6xf32>
    %cst_160 = arith.constant 1.000000e+00 : f32
    %475 = vector.broadcast %cst_160 : f32 to vector<4x6xf32>
    %476 = arith.subf %475, %413 : vector<4x6xf32>
    %477 = arith.mulf %476, %443 : vector<4x6xf32>
    %478 = arith.addf %474, %477 : vector<4x6xf32>
    %cst_161 = arith.constant 0.000000e+00 : f32
    %479 = vector.broadcast %cst_161 : f32 to vector<4x6xf32>
    %480 = arith.subf %479, %478 : vector<4x6xf32>
    %481 = arith.mulf %408, %459 : vector<4x6xf32>
    %cst_162 = arith.constant 1.000000e+00 : f32
    %482 = vector.broadcast %cst_162 : f32 to vector<4x6xf32>
    %483 = arith.subf %482, %408 : vector<4x6xf32>
    %484 = arith.mulf %483, %473 : vector<4x6xf32>
    %485 = arith.addf %481, %484 : vector<4x6xf32>
    %486 = arith.subf %480, %485 : vector<4x6xf32>
    %487 = tpu.iota {dimensions = array<i32: 1>} : vector<1x6xi32>
    %c2_i32_163 = arith.constant 2 : i32
    %488 = vector.broadcast %c2_i32_163 : i32 to vector<1x6xi32>
    %489 = arith.cmpi slt, %487, %488 : vector<1x6xi32>
    %cst_164 = arith.constant 1.000000e+00 : f32
    %cst_165 = arith.constant 1.000000e-01 : f32
    %490 = vector.broadcast %cst_164 : f32 to vector<1x6xf32>
    %491 = vector.broadcast %cst_165 : f32 to vector<1x6xf32>
    %492 = arith.select %489, %490, %491 : vector<1x6xi1>, vector<1x6xf32>
    %493 = vector.broadcast %492 : vector<1x6xf32> to vector<4x6xf32>
    %494 = arith.mulf %486, %493 : vector<4x6xf32>
    %cst_166 = arith.constant dense<0.000000e+00> : vector<4xf32>
    %495 = vector.multi_reduction <add>, %494, %cst_166 [1] : vector<4x6xf32> to vector<4xf32>
    %496 = vector.shape_cast %495 : vector<4xf32> to vector<4x1xf32>
    %cst_167 = arith.constant dense<0.000000e+00> : vector<1xf32>
    %497 = vector.multi_reduction <add>, %496, %cst_167 [0] : vector<4x1xf32> to vector<1xf32>
    %498 = vector.shape_cast %497 : vector<1xf32> to vector<1x1xf32>
    %499 = arith.addf %395, %403 : vector<4x6xf32>
    %500 = vector.broadcast %492 : vector<1x6xf32> to vector<4x6xf32>
    %501 = arith.mulf %499, %500 : vector<4x6xf32>
    %cst_168 = arith.constant dense<0.000000e+00> : vector<4xf32>
    %502 = vector.multi_reduction <add>, %501, %cst_168 [1] : vector<4x6xf32> to vector<4xf32>
    %503 = vector.shape_cast %502 : vector<4xf32> to vector<4x1xf32>
    %cst_169 = arith.constant dense<0.000000e+00> : vector<1xf32>
    %504 = vector.multi_reduction <add>, %503, %cst_169 [0] : vector<4x1xf32> to vector<1xf32>
    %505 = vector.shape_cast %504 : vector<1xf32> to vector<1x1xf32>
    %cst_170 = arith.constant 5.000000e-01 : f32
    %506 = vector.broadcast %cst_170 : f32 to vector<1x1xf32>
    %507 = arith.mulf %505, %506 : vector<1x1xf32>
    %508 = arith.subf %498, %507 : vector<1x1xf32>
    %509 = vector.shape_cast %508 : vector<1x1xf32> to vector<1x1xf32>
    %510 = vector.broadcast %509 : vector<1x1xf32> to vector<1x128xf32>
    %c0_171 = arith.constant 0 : index
    %c0_172 = arith.constant 0 : index
    %511 = vector.load %arg5[%c0_171, %c0_172] : memref<1x128xf32, #tpu.memory_space<vmem>>, vector<1x128xf32>
    tpu.vector_store %arg5[%c0_171, %c0_172], %510 {strides = array<i32>} : memref<1x128xf32, #tpu.memory_space<vmem>>, vector<1x128xf32>,
    return
  }
}

</mosaic_0001>

<llo_original>
// kernel: mutual_information_loss.1
$region0: #{mutual_information_loss.1}
  #allocation0 [shape = 'u32[]', space=smem, size = 0x4, offset = 0x4, fixed_abs, tag = 'smem constant byte address 0x4 - core index']
  #allocation1 [shape = 'u32[144,128]{1,0:T(1,128)}', space=vmem, size = 0x12000, scoped, tag = 'internal scratch']
  %s0 = inlined_call_operand.vmem [shape: f32[193,128], index: 0, kind: input, shape index: {}]
  %s1 = inlined_call_operand.vmem [shape: f32[24,193], index: 1, kind: input, shape index: {}]
  %s2 = inlined_call_operand.vmem [shape: f32[6,4,8,64], index: 2, kind: input, shape index: {}]
  %s3 = inlined_call_operand.vmem [shape: f32[8,12], index: 3, kind: input, shape index: {}]
  %s4 = inlined_call_operand.vmem [shape: f32[2,4,6], index: 4, kind: input, shape index: {}]
  %s5 = inlined_call_operand.hbm [shape: f32[1,128], index: 5, kind: output, shape index: {}]
  %s6 = sld [smem:[#allocation0]]
  $region30: #{mutual_information_loss.1} parent=0
    _
  %s8 = ssub.s32 1, %s6
  %s9 = scalar_select 0, %s8, %s6
  $region1: #{mutual_information_loss.1} parent=0
    #allocation2 [shape = 'u8[512]{0}', space=vmem, size = 0x400, scoped, tag = 'output window, operand 0, single buffered']
    #allocation3 [shape = 's32[1]{0}', space=sflag, size = 0x4, scoped, tag = 'scoped memory for mutual_information_loss.1']
    %10 = vsyncpa [#allocation3], 0
    // Predicated region
    $region2: #{mutual_information_loss.1} parent=1 // pred_check
      _
    $region3: #{mutual_information_loss.1} parent=1 // pred_check_branch
      %12 = sbr.rel (0) target = $region5
    $region4: #{mutual_information_loss.1} parent=1 // pred_region
      _
    $region5: #{mutual_information_loss.1} parent=1 // pred_fallthru
      _
    // Predicated region
    $region6: #{mutual_information_loss.1} parent=1 // pred_check
      _
    $region7: #{mutual_information_loss.1} parent=1 // pred_check_branch
      %14 = sbr.rel (0) target = $region9
    $region8: #{mutual_information_loss.1} parent=1 // pred_region
      _
    $region9: #{mutual_information_loss.1} parent=1 // pred_fallthru
      _
    // Predicated region
    $region10: #{mutual_information_loss.1} parent=1 // pred_check
      _
    $region11: #{mutual_information_loss.1} parent=1 // pred_check_branch
      %16 = sbr.rel (0) target = $region13
    $region12: #{mutual_information_loss.1} parent=1 // pred_region
      _
    $region13: #{mutual_information_loss.1} parent=1 // pred_fallthru
      _
    // Predicated region
    $region14: #{mutual_information_loss.1} parent=1 // pred_check
      _
    $region15: #{mutual_information_loss.1} parent=1 // pred_check_branch
      %18 = sbr.rel (0) target = $region17
    $region16: #{mutual_information_loss.1} parent=1 // pred_region
      _
    $region17: #{mutual_information_loss.1} parent=1 // pred_fallthru
      _
    // Predicated region
    $region18: #{mutual_information_loss.1} parent=1 // pred_check
      _
    $region19: #{mutual_information_loss.1} parent=1 // pred_check_branch
      %20 = sbr.rel (0) target = $region21
    $region20: #{mutual_information_loss.1} parent=1 // pred_region
      _
    $region21: #{mutual_information_loss.1} parent=1 // pred_fallthru
      _
    %v21 = vld [vmem:[%s1] sm:$0xff]
    %v22 = vld [vmem:[%s1 + $0x8] sm:$0xff]
    %v23 = vld [vmem:[%s1 + $0x10] sm:$0xff]
    %v24 = vld [vmem:[%s1 + $0x18] sm:$0xff]
    %v25 = vld [vmem:[%s1 + $0x20] sm:$0xff]
    %v26 = vld [vmem:[%s1 + $0x28] sm:$0xff]
    %v27 = vld [vmem:[%s0] sm:$0xff]
    %v28 = vld [vmem:[%s0 + $0x8] sm:$0xff]
    %v29 = vld [vmem:[%s0 + $0x10] sm:$0xff]
    %v30 = vld [vmem:[%s0 + $0x18] sm:$0xff]
    %v31 = vld [vmem:[%s0 + $0x20] sm:$0xff]
    %v32 = vld [vmem:[%s0 + $0x28] sm:$0xff]
    %v33 = vld [vmem:[%s0 + $0x30] sm:$0xff]
    %v34 = vld [vmem:[%s0 + $0x38] sm:$0xff]
    %v35 = vld [vmem:[%s0 + $0x40] sm:$0xff]
    %v36 = vld [vmem:[%s0 + $0x48] sm:$0xff]
    %v37 = vld [vmem:[%s0 + $0x50] sm:$0xff]
    %v38 = vld [vmem:[%s0 + $0x58] sm:$0xff]
    %v39 = vld [vmem:[%s0 + $0x60] sm:$0xff]
    %v40 = vld [vmem:[%s0 + $0x68] sm:$0xff]
    %v41 = vld [vmem:[%s0 + $0x70] sm:$0xff]
    %v42 = vld [vmem:[%s0 + $0x78] sm:$0xff]
    %v43 = vld [vmem:[%s0 + $0x80] sm:$0xff]
    %v44 = vld [vmem:[%s0 + $0x88] sm:$0xff]
    %v45 = vld [vmem:[%s0 + $0x90] sm:$0xff]
    %v46 = vld [vmem:[%s0 + $0x98] sm:$0xff]
    %v47 = vld [vmem:[%s0 + $0xa0] sm:$0xff]
    %v48 = vld [vmem:[%s0 + $0xa8] sm:$0xff]
    %v49 = vld [vmem:[%s0 + $0xb0] sm:$0xff]
    %v50 = vld [vmem:[%s0 + $0xb8] sm:$0xff]
    %v51 = vld [vmem:[%s0 + $0xc0] sm:$0x1]
    %vm52 = vcmask 531456
    %v54 = vsel %vm52, %v22, 0
    %v57 = vsel %vm52, %v24, 0
    %v60 = vsel %vm52, %v26, 0
    %vm62 = vcmask 1040384
    %v64 = vsel %vm62, %v51, 0
    %66 = vmatprep.subr.mxu0 0.0
    %67 = vmatpush1.msra.mxu0 %v27
    %68 = vmatprep.subr.mxu0 0.0
    %69 = vmatpush1.msra.mxu0 %v28
    %70 = vmatprep.subr.mxu0 0.0
    %71 = vmatpush1.msra.mxu0 %v29
    %72 = vmatprep.subr.mxu0 0.0
    %73 = vmatpush1.msra.mxu0 %v30
    %74 = vmatprep.subr.mxu0 0.0
    %75 = vmatpush1.msra.mxu0 %v31
    %76 = vmatprep.subr.mxu0 0.0
    %77 = vmatpush1.msra.mxu0 %v32
    %78 = vmatprep.subr.mxu0 0.0
    %79 = vmatpush1.msra.mxu0 %v33
    %80 = vmatprep.subr.mxu0 0.0
    %81 = vmatpush1.msra.mxu0 %v34
    %82 = vmatprep.subr.mxu0 0.0
    %83 = vmatpush1.msra.mxu0 %v35
    %84 = vmatprep.subr.mxu0 0.0
    %85 = vmatpush1.msra.mxu0 %v36
    %86 = vmatprep.subr.mxu0 0.0
    %87 = vmatpush1.msra.mxu0 %v37
    %88 = vmatprep.subr.mxu0 0.0
    %89 = vmatpush1.msra.mxu0 %v38
    %90 = vmatprep.subr.mxu0 0.0
    %91 = vmatpush1.msra.mxu0 %v39
    %92 = vmatprep.subr.mxu0 0.0
    %93 = vmatpush1.msra.mxu0 %v40
    %94 = vmatprep.subr.mxu0 0.0
    %95 = vmatpush1.msra.mxu0 %v41
    %96 = vmatprep.subr.mxu0 0.0
    %97 = vmatpush1.msra.mxu0 %v42
    %98 = vmatprep.subr.mxu0 0.0
    %99 = vmatpush1.msra.mxu0 %v43
    %100 = vmatprep.subr.mxu0 0.0
    %101 = vmatpush1.msra.mxu0 %v44
    %102 = vmatprep.subr.mxu0 0.0
    %103 = vmatpush1.msra.mxu0 %v45
    %104 = vmatprep.subr.mxu0 0.0
    %105 = vmatpush1.msra.mxu0 %v46
    %106 = vmatprep.subr.mxu0 0.0
    %107 = vmatpush1.msra.mxu0 %v47
    %108 = vmatprep.subr.mxu0 0.0
    %109 = vmatpush1.msra.mxu0 %v48
    %110 = vmatprep.subr.mxu0 0.0
    %111 = vmatpush1.msra.mxu0 %v49
    %112 = vmatprep.subr.mxu0 0.0
    %113 = vmatpush1.msra.mxu0 %v50
    %114 = vmatprep.subr.mxu0 0.0
    %115 = vmatpush1.msra.mxu0 %v64
    %116 = vmatprep.subr.mxu0 0.0
    %117 = vmatpush1.msra.mxu0 0.0
    %118 = vmatprep.subr.mxu0 0.0
    %119 = vmatpush1.msra.mxu0 0.0
    %120 = vmatprep.subr.mxu0 0.0
    %121 = vmatpush1.msra.mxu0 0.0
    %122 = vmatprep.subr.mxu0 0.0
    %123 = vmatpush1.msra.mxu0 0.0
    %124 = vmatprep.subr.mxu0 0.0
    %125 = vmatpush1.msra.mxu0 0.0
    %126 = vmatprep.subr.mxu0 0.0
    %127 = vmatpush1.msra.mxu0 0.0
    %128 = vmatprep.subr.mxu0 0.0
    %129 = vmatpush1.msra.mxu0 0.0
    %130 = vmatprep.mubr.f32.mxu0 %v54
    %131 = vmatmul.mubr.f32.gmra.mrb[0].mxu0 %v21
    %v132 = vpop.f32.mrb[0].mxu0
    %v133 = vadd.f32 0.0, %v132
    %v134 = vpop.f32.mrb[0].mxu0
    %135 = vmatprep.mubr.f32.mxu0 %v57
    %136 = vmatmul.mubr.f32.gmra.mrb[0].mxu0 %v23
    %v137 = vpop.f32.mrb[0].mxu0
    %v138 = vadd.f32 0.0, %v137
    %v139 = vpop.f32.mrb[0].mxu0
    %140 = vmatprep.mubr.f32.mxu0 %v60
    %141 = vmatmul.mubr.f32.gmra.mrb[0].mxu0 %v25
    %v142 = vpop.f32.mrb[0].mxu0
    %v143 = vadd.f32 0.0, %v142
    %v144 = vpop.f32.mrb[0].mxu0
    %145 = vdwg.mxu0
    %vm146 = vcmp.ge.f32.partialorder %v133, 0.0
    %vm147 = vcmp.ge.f32.partialorder %v138, 0.0
    %vm148 = vcmp.ge.f32.partialorder %v143, 0.0
    %v149 = vmul.f32 %v133, 0.01
    %v150 = vmul.f32 %v138, 0.01
    %v151 = vmul.f32 %v143, 0.01
    %v152 = vsel %vm146, %v133, %v149
    %v153 = vsel %vm147, %v138, %v150
    %v154 = vsel %vm148, %v143, %v151
    %v155 = vlaneseq
    %v156 = vand.u32 %v155, 127
    %v157 = vld [vmem:[%s3] sm:$0xff]
    %v158 = vld [vmem:[%s2] sm:$0xff]
    %s159 = scalar_lea.vmem %s2, 8
    %v160 = vld [vmem:[%s159] sm:$0xff]
    %s161 = scalar_lea.vmem %s2, 16
    %v162 = vld [vmem:[%s161] sm:$0xff]
    %s163 = scalar_lea.vmem %s2, 24
    %v164 = vld [vmem:[%s163] sm:$0xff]
    %v165 = vlaneseq
    %v166 = vshrl.u32 %v165, 7
    %v167 = vsub.s32 0, %v166
    %v168 = vrot.slane %v152, %v167
    %v169 = vmul.f32 %v168, %v158
    %v170 = vlaneseq
    %v171 = vshrl.u32 %v170, 7
    %v172 = vsub.s32 1, %v171
    %v173 = vrot.slane %v152, %v172
    %v174 = vmul.f32 %v173, %v160
    %v175 = vadd.f32 %v169, %v174
    %v176 = vlaneseq
    %v177 = vshrl.u32 %v176, 7
    %v178 = vsub.s32 2, %v177
    %v179 = vrot.slane %v152, %v178
    %v180 = vmul.f32 %v179, %v162
    %v181 = vadd.f32 %v175, %v180
    %v182 = vlaneseq
    %v183 = vshrl.u32 %v182, 7
    %v184 = vsub.s32 3, %v183
    %v185 = vrot.slane %v152, %v184
    %v186 = vmul.f32 %v185, %v164
    %v187 = vadd.f32 %v181, %v186
    %vm188 = vcmask 523264
    %v189 = vsel %vm188, %v187, 0.0
    %190 = vadd.xlane.f32.xlu0 %v189
    %v191 = vpop.xlane.xlu0 %190
    %vm192 = vcmp.eq.s32.totalorder %v156, 0
    %v193 = vsel %vm192, %v191, 0.0
    %v194 = vadd.f32 %v157, %v193
    %196 = vrot.lane.b32.xlu0 %v158, 64
    %v197 = vpop.permute.xlu0 %196
    %v199 = vmul.f32 %v168, %v197
    %201 = vrot.lane.b32.xlu0 %v160, 64
    %v202 = vpop.permute.xlu0 %201
    %v204 = vmul.f32 %v173, %v202
    %v205 = vadd.f32 %v199, %v204
    %207 = vrot.lane.b32.xlu0 %v162, 64
    %v208 = vpop.permute.xlu0 %207
    %v210 = vmul.f32 %v179, %v208
    %v211 = vadd.f32 %v205, %v210
    %213 = vrot.lane.b32.xlu0 %v164, 64
    %v214 = vpop.permute.xlu0 %213
    %v216 = vmul.f32 %v185, %v214
    %v217 = vadd.f32 %v211, %v216
    %219 = vrot.lane.b32.xlu0 %v217, 64
    %v220 = vpop.permute.xlu0 %219
    %v222 = vsel %vm188, %v220, 0.0
    %223 = vadd.xlane.f32.xlu0 %v222
    %v224 = vpop.xlane.xlu0 %223
    %vm225 = vcmp.eq.s32.totalorder %v156, 1
    %v226 = vsel %vm225, %v224, 0.0
    %v227 = vadd.f32 %v194, %v226
    %s228 = scalar_lea.vmem %s2, 32
    %v229 = vld [vmem:[%s228] sm:$0xff]
    %s230 = scalar_lea.vmem %s2, 40
    %v231 = vld [vmem:[%s230] sm:$0xff]
    %s232 = scalar_lea.vmem %s2, 48
    %v233 = vld [vmem:[%s232] sm:$0xff]
    %s234 = scalar_lea.vmem %s2, 56
    %v235 = vld [vmem:[%s234] sm:$0xff]
    %v236 = vlaneseq
    %v237 = vshrl.u32 %v236, 7
    %v238 = vsub.s32 4, %v237
    %v239 = vrot.slane %v152, %v238
    %v240 = vmul.f32 %v239, %v229
    %v241 = vlaneseq
    %v242 = vshrl.u32 %v241, 7
    %v243 = vsub.s32 5, %v242
    %v244 = vrot.slane %v152, %v243
    %v245 = vmul.f32 %v244, %v231
    %v246 = vadd.f32 %v240, %v245
    %v247 = vlaneseq
    %v248 = vshrl.u32 %v247, 7
    %v249 = vsub.s32 6, %v248
    %v250 = vrot.slane %v152, %v249
    %v251 = vmul.f32 %v250, %v233
    %v252 = vadd.f32 %v246, %v251
    %v253 = vlaneseq
    %v254 = vshrl.u32 %v253, 7
    %v255 = vsub.s32 7, %v254
    %v256 = vrot.slane %v152, %v255
    %v257 = vmul.f32 %v256, %v235
    %v258 = vadd.f32 %v252, %v257
    %v259 = vsel %vm188, %v258, 0.0
    %260 = vadd.xlane.f32.xlu0 %v259
    %v261 = vpop.xlane.xlu0 %260
    %vm262 = vcmp.eq.s32.totalorder %v156, 2
    %v263 = vsel %vm262, %v261, 0.0
    %v264 = vadd.f32 %v227, %v263
    %266 = vrot.lane.b32.xlu0 %v229, 64
    %v267 = vpop.permute.xlu0 %266
    %v269 = vmul.f32 %v239, %v267
    %271 = vrot.lane.b32.xlu0 %v231, 64
    %v272 = vpop.permute.xlu0 %271
    %v274 = vmul.f32 %v244, %v272
    %v275 = vadd.f32 %v269, %v274
    %277 = vrot.lane.b32.xlu0 %v233, 64
    %v278 = vpop.permute.xlu0 %277
    %v280 = vmul.f32 %v250, %v278
    %v281 = vadd.f32 %v275, %v280
    %283 = vrot.lane.b32.xlu0 %v235, 64
    %v284 = vpop.permute.xlu0 %283
    %v286 = vmul.f32 %v256, %v284
    %v287 = vadd.f32 %v281, %v286
    %289 = vrot.lane.b32.xlu0 %v287, 64
    %v290 = vpop.permute.xlu0 %289
    %v292 = vsel %vm188, %v290, 0.0
    %293 = vadd.xlane.f32.xlu0 %v292
    %v294 = vpop.xlane.xlu0 %293
    %vm295 = vcmp.eq.s32.totalorder %v156, 3
    %v296 = vsel %vm295, %v294, 0.0
    %v297 = vadd.f32 %v264, %v296
    %s298 = scalar_lea.vmem %s2, 64
    %v299 = vld [vmem:[%s298] sm:$0xff]
    %s300 = scalar_lea.vmem %s2, 72
    %v301 = vld [vmem:[%s300] sm:$0xff]
    %s302 = scalar_lea.vmem %s2, 80
    %v303 = vld [vmem:[%s302] sm:$0xff]
    %s304 = scalar_lea.vmem %s2, 88
    %v305 = vld [vmem:[%s304] sm:$0xff]
    %v306 = vlaneseq
    %v307 = vshrl.u32 %v306, 7
    %v308 = vsub.s32 0, %v307
    %v309 = vrot.slane %v153, %v308
    %v310 = vmul.f32 %v309, %v299
    %v311 = vlaneseq
    %v312 = vshrl.u32 %v311, 7
    %v313 = vsub.s32 1, %v312
    %v314 = vrot.slane %v153, %v313
    %v315 = vmul.f32 %v314, %v301
    %v316 = vadd.f32 %v310, %v315
    %v317 = vlaneseq
    %v318 = vshrl.u32 %v317, 7
    %v319 = vsub.s32 2, %v318
    %v320 = vrot.slane %v153, %v319
    %v321 = vmul.f32 %v320, %v303
    %v322 = vadd.f32 %v316, %v321
    %v323 = vlaneseq
    %v324 = vshrl.u32 %v323, 7
    %v325 = vsub.s32 3, %v324
    %v326 = vrot.slane %v153, %v325
    %v327 = vmul.f32 %v326, %v305
    %v328 = vadd.f32 %v322, %v327
    %v329 = vsel %vm188, %v328, 0.0
    %330 = vadd.xlane.f32.xlu0 %v329
    %v331 = vpop.xlane.xlu0 %330
    %vm332 = vcmp.eq.s32.totalorder %v156, 4
    %v333 = vsel %vm332, %v331, 0.0
    %v334 = vadd.f32 %v297, %v333
    %336 = vrot.lane.b32.xlu0 %v299, 64
    %v337 = vpop.permute.xlu0 %336
    %v339 = vmul.f32 %v309, %v337
    %341 = vrot.lane.b32.xlu0 %v301, 64
    %v342 = vpop.permute.xlu0 %341
    %v344 = vmul.f32 %v314, %v342
    %v345 = vadd.f32 %v339, %v344
    %347 = vrot.lane.b32.xlu0 %v303, 64
    %v348 = vpop.permute.xlu0 %347
    %v350 = vmul.f32 %v320, %v348
    %v351 = vadd.f32 %v345, %v350
    %353 = vrot.lane.b32.xlu0 %v305, 64
    %v354 = vpop.permute.xlu0 %353
    %v356 = vmul.f32 %v326, %v354
    %v357 = vadd.f32 %v351, %v356
    %359 = vrot.lane.b32.xlu0 %v357, 64
    %v360 = vpop.permute.xlu0 %359
    %v362 = vsel %vm188, %v360, 0.0
    %363 = vadd.xlane.f32.xlu0 %v362
    %v364 = vpop.xlane.xlu0 %363
    %vm365 = vcmp.eq.s32.totalorder %v156, 5
    %v366 = vsel %vm365, %v364, 0.0
    %v367 = vadd.f32 %v334, %v366
    %s368 = scalar_lea.vmem %s2, 96
    %v369 = vld [vmem:[%s368] sm:$0xff]
    %s370 = scalar_lea.vmem %s2, 104
    %v371 = vld [vmem:[%s370] sm:$0xff]
    %s372 = scalar_lea.vmem %s2, 112
    %v373 = vld [vmem:[%s372] sm:$0xff]
    %s374 = scalar_lea.vmem %s2, 120
    %v375 = vld [vmem:[%s374] sm:$0xff]
    %v376 = vlaneseq
    %v377 = vshrl.u32 %v376, 7
    %v378 = vsub.s32 4, %v377
    %v379 = vrot.slane %v153, %v378
    %v380 = vmul.f32 %v379, %v369
    %v381 = vlaneseq
    %v382 = vshrl.u32 %v381, 7
    %v383 = vsub.s32 5, %v382
    %v384 = vrot.slane %v153, %v383
    %v385 = vmul.f32 %v384, %v371
    %v386 = vadd.f32 %v380, %v385
    %v387 = vlaneseq
    %v388 = vshrl.u32 %v387, 7
    %v389 = vsub.s32 6, %v388
    %v390 = vrot.slane %v153, %v389
    %v391 = vmul.f32 %v390, %v373
    %v392 = vadd.f32 %v386, %v391
    %v393 = vlaneseq
    %v394 = vshrl.u32 %v393, 7
    %v395 = vsub.s32 7, %v394
    %v396 = vrot.slane %v153, %v395
    %v397 = vmul.f32 %v396, %v375
    %v398 = vadd.f32 %v392, %v397
    %v399 = vsel %vm188, %v398, 0.0
    %400 = vadd.xlane.f32.xlu0 %v399
    %v401 = vpop.xlane.xlu0 %400
    %vm402 = vcmp.eq.s32.totalorder %v156, 6
    %v403 = vsel %vm402, %v401, 0.0
    %v404 = vadd.f32 %v367, %v403
    %406 = vrot.lane.b32.xlu0 %v369, 64
    %v407 = vpop.permute.xlu0 %406
    %v409 = vmul.f32 %v379, %v407
    %411 = vrot.lane.b32.xlu0 %v371, 64
    %v412 = vpop.permute.xlu0 %411
    %v414 = vmul.f32 %v384, %v412
    %v415 = vadd.f32 %v409, %v414
    %417 = vrot.lane.b32.xlu0 %v373, 64
    %v418 = vpop.permute.xlu0 %417
    %v420 = vmul.f32 %v390, %v418
    %v421 = vadd.f32 %v415, %v420
    %423 = vrot.lane.b32.xlu0 %v375, 64
    %v424 = vpop.permute.xlu0 %423
    %v426 = vmul.f32 %v396, %v424
    %v427 = vadd.f32 %v421, %v426
    %429 = vrot.lane.b32.xlu0 %v427, 64
    %v430 = vpop.permute.xlu0 %429
    %v432 = vsel %vm188, %v430, 0.0
    %433 = vadd.xlane.f32.xlu0 %v432
    %v434 = vpop.xlane.xlu0 %433
    %vm435 = vcmp.eq.s32.totalorder %v156, 7
    %v436 = vsel %vm435, %v434, 0.0
    %v437 = vadd.f32 %v404, %v436
    %s438 = scalar_lea.vmem %s2, 128
    %v439 = vld [vmem:[%s438] sm:$0xff]
    %s440 = scalar_lea.vmem %s2, 136
    %v441 = vld [vmem:[%s440] sm:$0xff]
    %s442 = scalar_lea.vmem %s2, 144
    %v443 = vld [vmem:[%s442] sm:$0xff]
    %s444 = scalar_lea.vmem %s2, 152
    %v445 = vld [vmem:[%s444] sm:$0xff]
    %v446 = vlaneseq
    %v447 = vshrl.u32 %v446, 7
    %v448 = vsub.s32 0, %v447
    %v449 = vrot.slane %v154, %v448
    %v450 = vmul.f32 %v449, %v439
    %v451 = vlaneseq
    %v452 = vshrl.u32 %v451, 7
    %v453 = vsub.s32 1, %v452
    %v454 = vrot.slane %v154, %v453
    %v455 = vmul.f32 %v454, %v441
    %v456 = vadd.f32 %v450, %v455
    %v457 = vlaneseq
    %v458 = vshrl.u32 %v457, 7
    %v459 = vsub.s32 2, %v458
    %v460 = vrot.slane %v154, %v459
    %v461 = vmul.f32 %v460, %v443
    %v462 = vadd.f32 %v456, %v461
    %v463 = vlaneseq
    %v464 = vshrl.u32 %v463, 7
    %v465 = vsub.s32 3, %v464
    %v466 = vrot.slane %v154, %v465
    %v467 = vmul.f32 %v466, %v445
    %v468 = vadd.f32 %v462, %v467
    %v469 = vsel %vm188, %v468, 0.0
    %470 = vadd.xlane.f32.xlu0 %v469
    %v471 = vpop.xlane.xlu0 %470
    %vm472 = vcmp.eq.s32.totalorder %v156, 8
    %v473 = vsel %vm472, %v471, 0.0
    %v474 = vadd.f32 %v437, %v473
    %476 = vrot.lane.b32.xlu0 %v439, 64
    %v477 = vpop.permute.xlu0 %476
    %v479 = vmul.f32 %v449, %v477
    %481 = vrot.lane.b32.xlu0 %v441, 64
    %v482 = vpop.permute.xlu0 %481
    %v484 = vmul.f32 %v454, %v482
    %v485 = vadd.f32 %v479, %v484
    %487 = vrot.lane.b32.xlu0 %v443, 64
    %v488 = vpop.permute.xlu0 %487
    %v490 = vmul.f32 %v460, %v488
    %v491 = vadd.f32 %v485, %v490
    %493 = vrot.lane.b32.xlu0 %v445, 64
    %v494 = vpop.permute.xlu0 %493
    %v496 = vmul.f32 %v466, %v494
    %v497 = vadd.f32 %v491, %v496
    %499 = vrot.lane.b32.xlu0 %v497, 64
    %v500 = vpop.permute.xlu0 %499
    %v502 = vsel %vm188, %v500, 0.0
    %503 = vadd.xlane.f32.xlu0 %v502
    %v504 = vpop.xlane.xlu0 %503
    %vm505 = vcmp.eq.s32.totalorder %v156, 9
    %v506 = vsel %vm505, %v504, 0.0
    %v507 = vadd.f32 %v474, %v506
    %s508 = scalar_lea.vmem %s2, 160
    %v509 = vld [vmem:[%s508] sm:$0xff]
    %s510 = scalar_lea.vmem %s2, 168
    %v511 = vld [vmem:[%s510] sm:$0xff]
    %s512 = scalar_lea.vmem %s2, 176
    %v513 = vld [vmem:[%s512] sm:$0xff]
    %s514 = scalar_lea.vmem %s2, 184
    %v515 = vld [vmem:[%s514] sm:$0xff]
    %v516 = vlaneseq
    %v517 = vshrl.u32 %v516, 7
    %v518 = vsub.s32 4, %v517
    %v519 = vrot.slane %v154, %v518
    %v520 = vmul.f32 %v519, %v509
    %v521 = vlaneseq
    %v522 = vshrl.u32 %v521, 7
    %v523 = vsub.s32 5, %v522
    %v524 = vrot.slane %v154, %v523
    %v525 = vmul.f32 %v524, %v511
    %v526 = vadd.f32 %v520, %v525
    %v527 = vlaneseq
    %v528 = vshrl.u32 %v527, 7
    %v529 = vsub.s32 6, %v528
    %v530 = vrot.slane %v154, %v529
    %v531 = vmul.f32 %v530, %v513
    %v532 = vadd.f32 %v526, %v531
    %v533 = vlaneseq
    %v534 = vshrl.u32 %v533, 7
    %v535 = vsub.s32 7, %v534
    %v536 = vrot.slane %v154, %v535
    %v537 = vmul.f32 %v536, %v515
    %v538 = vadd.f32 %v532, %v537
    %v539 = vsel %vm188, %v538, 0.0
    %540 = vadd.xlane.f32.xlu0 %v539
    %v541 = vpop.xlane.xlu0 %540
    %vm542 = vcmp.eq.s32.totalorder %v156, 10
    %v543 = vsel %vm542, %v541, 0.0
    %v544 = vadd.f32 %v507, %v543
    %546 = vrot.lane.b32.xlu0 %v509, 64
    %v547 = vpop.permute.xlu0 %546
    %v549 = vmul.f32 %v519, %v547
    %551 = vrot.lane.b32.xlu0 %v511, 64
    %v552 = vpop.permute.xlu0 %551
    %v554 = vmul.f32 %v524, %v552
    %v555 = vadd.f32 %v549, %v554
    %557 = vrot.lane.b32.xlu0 %v513, 64
    %v558 = vpop.permute.xlu0 %557
    %v560 = vmul.f32 %v530, %v558
    %v561 = vadd.f32 %v555, %v560
    %563 = vrot.lane.b32.xlu0 %v515, 64
    %v564 = vpop.permute.xlu0 %563
    %v566 = vmul.f32 %v536, %v564
    %v567 = vadd.f32 %v561, %v566
    %569 = vrot.lane.b32.xlu0 %v567, 64
    %v570 = vpop.permute.xlu0 %569
    %v572 = vsel %vm188, %v570, 0.0
    %573 = vadd.xlane.f32.xlu0 %v572
    %v574 = vpop.xlane.xlu0 %573
    %vm575 = vcmp.eq.s32.totalorder %v156, 11
    %v576 = vsel %vm575, %v574, 0.0
    %v577 = vadd.f32 %v544, %v576
    %v578 = vtanh.pop %v577
    %v579 = vld [vmem:[%s4] sm:$0xf]
    %v580 = vmul.f32 %v578, 0.5
    %v581 = vmul.f32 %v580, 1.442695
    %v582 = vpow.pop %v581
    %v584 = vrot.slane %v582, 4
    %v586 = vmul.f32 %v579, %v584
    %v587 = vadd.f32 %v586, %v578
    %s588 = scalar_lea.vmem %s4, 4
    %v589 = vld [vmem:[%s588] sm:$0xf]
    %590 = vrot.lane.b32.xlu0 %v584, 122
    %v591 = vpop.permute.xlu0 %590
    %v593 = vmul.f32 %v589, %v591
    %595 = vrot.lane.b32.xlu0 %v578, 122
    %v596 = vpop.permute.xlu0 %595
    %v598 = vadd.f32 %v593, %v596
    %v599 = vmul.f32 %v578, 2.0
    %v600 = vmul.f32 %v599, 1.442695
    %v601 = vpow.pop %v600
    %v602 = vsub.f32 %v578, %v596
    %v603 = vmul.f32 %v602, %v602
    %604 = vrot.lane.b32.xlu0 %v578, 6
    %v605 = vpop.permute.xlu0 %604
    %v607 = vsub.f32 %v578, %v605
    %v609 = vrot.slane %v603, 4
    %v611 = vadd.f32 %v601, %v609
    %v612 = vmul.f32 %v601, 2.0
    %614 = vrot.lane.b32.xlu0 %v612, 122
    %v615 = vpop.permute.xlu0 %614
    %v617 = vrcp.pop %v615
    %v618 = vmul.f32 %v611, %v617
    %620 = vrot.lane.b32.xlu0 %v618, 6
    %v621 = vpop.permute.xlu0 %620
    %v623 = vadd.f32 %v607, %v621
    %v624 = vsub.f32 %v623, 0.5
    %625 = vrot.lane.b32.xlu0 %v609, 6
    %v626 = vpop.permute.xlu0 %625
    %v628 = vadd.f32 %v601, %v626
    %629 = vrot.lane.b32.xlu0 %v612, 6
    %v630 = vpop.permute.xlu0 %629
    %v632 = vrcp.pop %v630
    %v633 = vmul.f32 %v628, %v632
    %635 = vrot.lane.b32.xlu0 %v633, 122
    %v636 = vpop.permute.xlu0 %635
    %v638 = vadd.f32 %v602, %v636
    %v639 = vsub.f32 %v638, 0.5
    %v640 = vxor.u32 %v587, 2147483648
    %v641 = vmul.f32 %v640, 1.442695
    %v642 = vpow.pop %v641
    %v643 = vadd.f32 %v642, 1.0
    %v644 = vrcp.pop %v643
    %v645 = vmul.f32 1.0, %v644
    %v646 = vxor.u32 %v598, 2147483648
    %v647 = vmul.f32 %v646, 1.442695
    %v648 = vpow.pop %v647
    %v649 = vadd.f32 %v648, 1.0
    %v650 = vrcp.pop %v649
    %v651 = vmul.f32 1.0, %v650
    %v652 = vsub.f32 0.0, %v587
    %v653 = vmax.f32 %v652, 0.0
    %v654 = vand.u32 2147483647, %v652
    %v655 = vsub.f32 0.0, %v654
    %v656 = vmul.f32 %v655, 1.442695
    %v657 = vpow.pop %v656
    %v658 = vadd.f32 %v657, 1.0
    %v659 = vlog2.pop %v658
    %v660 = vmul.f32 %v659, 0.6931472
    %v661 = vadd.f32 %v653, %v660
    %v662 = vsub.f32 0.0, %v661
    %v663 = vmax.f32 %v662, -100.0
    %v664 = vmax.f32 %v587, 0.0
    %v665 = vand.u32 2147483647, %v587
    %v666 = vsub.f32 0.0, %v665
    %v667 = vmul.f32 %v666, 1.442695
    %v668 = vpow.pop %v667
    %v669 = vadd.f32 %v668, 1.0
    %v670 = vlog2.pop %v669
    %v671 = vmul.f32 %v670, 0.6931472
    %v672 = vadd.f32 %v664, %v671
    %v673 = vsub.f32 0.0, %v672
    %v674 = vmax.f32 %v673, -100.0
    %v675 = vsub.f32 0.0, %v598
    %v676 = vmax.f32 %v675, 0.0
    %v677 = vand.u32 2147483647, %v675
    %v678 = vsub.f32 0.0, %v677
    %v679 = vmul.f32 %v678, 1.442695
    %v680 = vpow.pop %v679
    %v681 = vadd.f32 %v680, 1.0
    %v682 = vlog2.pop %v681
    %v683 = vmul.f32 %v682, 0.6931472
    %v684 = vadd.f32 %v676, %v683
    %v685 = vsub.f32 0.0, %v684
    %v686 = vmax.f32 %v685, -100.0
    %v687 = vmax.f32 %v598, 0.0
    %v688 = vand.u32 2147483647, %v598
    %v689 = vsub.f32 0.0, %v688
    %v690 = vmul.f32 %v689, 1.442695
    %v691 = vpow.pop %v690
    %v692 = vadd.f32 %v691, 1.0
    %v693 = vlog2.pop %v692
    %v694 = vmul.f32 %v693, 0.6931472
    %v695 = vadd.f32 %v687, %v694
    %v696 = vsub.f32 0.0, %v695
    %v697 = vmax.f32 %v696, -100.0
    %v698 = vmul.f32 %v651, %v663
    %v699 = vsub.f32 1.0, %v651
    %v700 = vmul.f32 %v699, %v674
    %v701 = vadd.f32 %v698, %v700
    %v702 = vsub.f32 0.0, %v701
    %v703 = vmul.f32 %v645, %v686
    %v704 = vsub.f32 1.0, %v645
    %v705 = vmul.f32 %v704, %v697
    %v706 = vadd.f32 %v703, %v705
    %v707 = vsub.f32 %v702, %v706
    %vm708 = vcmp.lt.s32.totalorder %v156, 2
    %v709 = vsel %vm708, 1.0, 0.1
    %v710 = vmul.f32 %v707, %v709
    %vm711 = vcmask 44032
    %v712 = vsel %vm711, %v710, 0.0
    %713 = vadd.xlane.f32.xlu0 %v712
    %v714 = vpop.xlane.xlu0 %713
    %vm715 = vcmask 1043456
    %v716 = vsel %vm715, %v714, 0.0
    %v717 = vrot.slane %v716, 4
    %v718 = vadd.f32 %v716, %v717
    %v719 = vrot.slane %v718, 2
    %v720 = vadd.f32 %v718, %v719
    %v721 = vrot.slane %v720, 1
    %v722 = vadd.f32 %v720, %v721
    %724 = vrot.lane.b32.xlu0 %v639, 6
    %v725 = vpop.permute.xlu0 %724
    %v727 = vadd.f32 %v624, %v725
    %729 = vrot.lane.b32.xlu0 %v709, 6
    %v730 = vpop.permute.xlu0 %729
    %v732 = vmul.f32 %v727, %v730
    %734 = vrot.lane.b32.xlu0 %v732, 122
    %v735 = vpop.permute.xlu0 %734
    %vm737 = vcmask 48132
    %v738 = vsel %vm737, %v735, 0.0
    %739 = vadd.xlane.f32.xlu0 %v738
    %v740 = vpop.xlane.xlu0 %739
    %v742 = vrot.slane %v740, 4
    %v744 = vsel %vm715, %v742, 0.0
    %v745 = vrot.slane %v744, 4
    %v746 = vadd.f32 %v744, %v745
    %v747 = vrot.slane %v746, 2
    %v748 = vadd.f32 %v746, %v747
    %v749 = vrot.slane %v748, 1
    %v750 = vadd.f32 %v748, %v749
    %v751 = vmul.f32 %v750, 0.5
    %v752 = vsub.f32 %v722, %v751
    %753 = vst [vmem:[#allocation2] sm:$0x1] %v752
    // Predicated region
    $region22: #{mutual_information_loss.1} parent=1 // pred_check
      _
    $region23: #{mutual_information_loss.1} parent=1 // pred_check_branch
      %755 = sbr.rel (0) target = $region25
    $region24: #{mutual_information_loss.1} parent=1 // pred_region
      %s757 = ssub.s32 16, 16
      %758 = vsyncadd [#allocation3], %s757
      %s760 = sshll.u32 [#allocation2], 4
      %s761 = int_to_ptr.vmem [resolvable:$true] %s760
      %763 = dma.vmem_to_hbm [thread:$0]  %s761, 16, %s5, [#allocation3]
    $region25: #{mutual_information_loss.1} parent=1 // pred_fallthru
      _
    // Predicated region
    $region26: #{mutual_information_loss.1} parent=1 // pred_check
      _
    $region27: #{mutual_information_loss.1} parent=1 // pred_check_branch
      %765 = sbr.rel (0) target = $region29
    $region28: #{mutual_information_loss.1} parent=1 // pred_region
      %766 = dma.done [#allocation3], 16
    $region29: #{mutual_information_loss.1} parent=1 // pred_fallthru
      _
    %767 = vsyncpa [#allocation3], 1

</llo_original>
